<compile_context>
chip_gen: v7x
topology: tpu7x:2x2x1
jax: 0.10.0
libtpu: 0.0.40
codegen_flags: <defaults>
</compile_context>

<pallas_src>
import functools
import math

import jax
import jax.numpy as jnp
import numpy as np
from jax import lax
from jax.experimental import pallas as pl
from jax.experimental.pallas import tpu as pltpu


def _round_up(x, m):
    return (x + m - 1) // m * m


# ----------------------------- Pallas kernel -------------------------------
def encoder_kernel(emb_ref, w_e2h_ref, b_e2h_ref,
                   wa_ref, ba_ref, wg_ref, bg_ref,
                   w_h2e_ref, b_h2e_ref,
                   conved_ref, combined_ref,
                   x_ref,
                   *, B, L, K, pad):
    # emb_ref:      (B*L, Ep)           embedded = tok + pos   (dropout = id)
    # w_e2h_ref:    (Ep, Hp)            b_e2h_ref: (1, Hp)
    # wa_ref/wg_ref:(1, K*Hp, Hp)       ba_ref/bg_ref: (1, 1, Hp)   (this layer)
    # w_h2e_ref:    (Hp, Ep)            b_h2e_ref: (1, Ep)
    # conved_ref / combined_ref: (B*L, Ep)
    # x_ref (scratch): (B, L + 2*pad, Hp) — activations, zero border rows give
    #                  the Conv1d "same" padding for free.
    scale = jnp.float32(math.sqrt(0.5))
    layer = pl.program_id(0)
    Hp = x_ref.shape[-1]
    M = B * L

    @pl.when(layer == 0)
    def _init():
        # Zero the whole padded activation scratch once (borders stay zero),
        # then run emb2hid for the full batch slab.
        x_ref[...] = jnp.zeros_like(x_ref)
        x0 = (jnp.dot(emb_ref[...], w_e2h_ref[...],
                      preferred_element_type=jnp.float32)
              + b_e2h_ref[...])                                   # (M, Hp)
        x_ref[:, pad:pad + L, :] = x0.reshape(B, L, Hp)

    # ---- conv layer `layer`: fused K-tap contraction + GLU + residual ----
    taps = [x_ref[:, t:t + L, :] for t in range(K)]               # K x (B, L, Hp)
    xcat = jnp.concatenate(taps, axis=-1).reshape(M, K * Hp)      # (M, K*Hp)
    x_cur = taps[pad].reshape(M, Hp)                              # center tap == x

    a = (jnp.dot(xcat, wa_ref[0], preferred_element_type=jnp.float32)
         + ba_ref[0])                                             # (M, Hp)
    g = (jnp.dot(xcat, wg_ref[0], preferred_element_type=jnp.float32)
         + bg_ref[0])                                             # (M, Hp)
    x_new = (a * jax.nn.sigmoid(g) + x_cur) * scale               # GLU + residual
    x_ref[:, pad:pad + L, :] = x_new.reshape(B, L, Hp)

    @pl.when(layer == pl.num_programs(0) - 1)
    def _finalize():
        xf = x_ref[:, pad:pad + L, :].reshape(M, Hp)
        conved = (jnp.dot(xf, w_h2e_ref[...],
                          preferred_element_type=jnp.float32)
                  + b_h2e_ref[...])                               # (M, Ep)
        conved_ref[...] = conved
        combined_ref[...] = (conved + emb_ref[...]) * scale


# ------------------------------- wrapper ------------------------------------
def encoder_forward(src, params):
    """src: int32 [B, L] token ids. Returns (conved, combined), each [B, L, E]."""
    B, L = src.shape
    E = params["tok_emb"].shape[1]
    H = params["w_e2h"].shape[1]
    NL = params["conv_w_oik"].shape[0]
    K = params["conv_w_oik"].shape[-1]
    assert K % 2 == 1, "PyTorch model only shape-consistent for odd kernel_size"
    pad = (K - 1) // 2
    Ep = _round_up(E, 128)
    Hp = _round_up(H, 128)
    M = B * L

    # Embedding lookups (gather) + positional embeddings: plain JAX glue.
    pos = jnp.arange(L, dtype=jnp.int32)
    embedded = (params["tok_emb"][src] + params["pos_emb"][pos][None, :, :]
                ).astype(jnp.float32)                             # (B, L, E)
    emb_p = jnp.pad(embedded, ((0, 0), (0, 0), (0, Ep - E))).reshape(M, Ep)

    # Lane-dense, zero-padded weights; conv weights fused to (NL, K*Hp, Hp)
    # and split into the two GLU halves on the host.
    w_e2h = jnp.pad(params["w_e2h"], ((0, Ep - E), (0, Hp - H)))
    b_e2h = jnp.pad(params["b_e2h"], ((0, 0), (0, Hp - H)))
    w_h2e = jnp.pad(params["w_h2e"], ((0, Hp - H), (0, Ep - E)))
    b_h2e = jnp.pad(params["b_h2e"], ((0, 0), (0, Ep - E)))

    conv_w = jnp.transpose(params["conv_w_oik"], (0, 3, 2, 1))     # (NL, K, H, 2H)
    wa = jnp.pad(conv_w[..., :H],
                 ((0, 0), (0, 0), (0, Hp - H), (0, Hp - H))).reshape(NL, K * Hp, Hp)
    wg = jnp.pad(conv_w[..., H:],
                 ((0, 0), (0, 0), (0, Hp - H), (0, Hp - H))).reshape(NL, K * Hp, Hp)
    ba = jnp.pad(params["conv_b"][..., :H], ((0, 0), (0, 0), (0, Hp - H)))  # (NL,1,Hp)
    bg = jnp.pad(params["conv_b"][..., H:], ((0, 0), (0, 0), (0, Hp - H)))

    kernel = functools.partial(encoder_kernel, B=B, L=L, K=K, pad=pad)

    conved_p, combined_p = pl.pallas_call(
        kernel,
        out_shape=(jax.ShapeDtypeStruct((M, Ep), jnp.float32),
                   jax.ShapeDtypeStruct((M, Ep), jnp.float32)),
        grid=(NL,),
        in_specs=[
            pl.BlockSpec((M, Ep), lambda l: (0, 0)),               # embedded
            pl.BlockSpec((Ep, Hp), lambda l: (0, 0)),              # w_e2h
            pl.BlockSpec((1, Hp), lambda l: (0, 0)),               # b_e2h
            pl.BlockSpec((1, K * Hp, Hp), lambda l: (l, 0, 0)),    # W_a (this layer)
            pl.BlockSpec((1, 1, Hp), lambda l: (l, 0, 0)),         # b_a
            pl.BlockSpec((1, K * Hp, Hp), lambda l: (l, 0, 0)),    # W_g (this layer)
            pl.BlockSpec((1, 1, Hp), lambda l: (l, 0, 0)),         # b_g
            pl.BlockSpec((Hp, Ep), lambda l: (0, 0)),              # w_h2e
            pl.BlockSpec((1, Ep), lambda l: (0, 0)),               # b_h2e
        ],
        out_specs=[
            pl.BlockSpec((M, Ep), lambda l: (0, 0)),
            pl.BlockSpec((M, Ep), lambda l: (0, 0)),
        ],
        scratch_shapes=[
            pltpu.VMEM((B, L + 2 * pad, Hp), jnp.float32),         # padded activations
        ],
        compiler_params=pltpu.CompilerParams(
            dimension_semantics=("arbitrary",)),
    )(emb_p, w_e2h, b_e2h, wa, ba, wg, bg, w_h2e, b_h2e)

    conved = conved_p.reshape(B, L, Ep)[..., :E]
    combined = combined_p.reshape(B, L, Ep)[..., :E]
    return conved, combined


# ------------------------- pure-JAX reference --------------------------------
def encoder_reference(src, params):
    scale = jnp.sqrt(jnp.float32(0.5))
    B, L = src.shape
    pos = jnp.arange(L, dtype=jnp.int32)
    embedded = (params["tok_emb"][src] + params["pos_emb"][pos][None, :, :]
                ).astype(jnp.float32)                             # (B, L, E)
    x = embedded @ params["w_e2h"] + params["b_e2h"]              # (B, L, H)
    conv_in = jnp.transpose(x, (0, 2, 1))                         # (B, H, L)  NCL
    NL = params["conv_w_oik"].shape[0]
    K = params["conv_w_oik"].shape[-1]
    pad = (K - 1) // 2
    for i in range(NL):
        w = params["conv_w_oik"][i]                               # (2H, H, K)
        b = params["conv_b"][i, 0]                                # (2H,)
        out = lax.conv_general_dilated(
            conv_in, w, window_strides=(1,), padding=[(pad, pad)],
            dimension_numbers=("NCH", "OIH", "NCH")) + b[None, :, None]
        a, g = jnp.split(out, 2, axis=1)
        conv_in = (a * jax.nn.sigmoid(g) + conv_in) * scale
    conved = jnp.transpose(conv_in, (0, 2, 1)) @ params["w_h2e"] + params["b_h2e"]
    combined = (conved + embedded) * scale
    return conved, combined


# ------------------------------- params --------------------------------------
def make_params(key, vocab, max_len, emb_dim, hid_dim, n_layers, kernel_size):
    ks = jax.random.split(key, 8 + n_layers * 2)
    p = {}
    p["tok_emb"] = jax.random.normal(ks[0], (vocab, emb_dim), jnp.float32) * 0.1
    p["pos_emb"] = jax.random.normal(ks[1], (max_len, emb_dim), jnp.float32) * 0.1
    # nn.Linear(emb, hid): torch weight (hid, emb) -> stored transposed (emb, hid)
    p["w_e2h"] = jax.random.normal(ks[2], (emb_dim, hid_dim), jnp.float32) * (1.0 / math.sqrt(emb_dim))
    p["b_e2h"] = jax.random.normal(ks[3], (1, hid_dim), jnp.float32) * 0.01
    p["w_h2e"] = jax.random.normal(ks[4], (hid_dim, emb_dim), jnp.float32) * (1.0 / math.sqrt(hid_dim))
    p["b_h2e"] = jax.random.normal(ks[5], (1, emb_dim), jnp.float32) * 0.01
    # Conv1d weights in torch layout (2H, H, K)
    conv_w_oik, conv_b = [], []
    for i in range(n_layers):
        w = jax.random.normal(ks[6 + 2 * i], (2 * hid_dim, hid_dim, kernel_size),
                              jnp.float32) * (1.0 / math.sqrt(hid_dim * kernel_size))
        b = jax.random.normal(ks[7 + 2 * i], (1, 2 * hid_dim), jnp.float32) * 0.01
        conv_w_oik.append(w)
        conv_b.append(b)
    p["conv_w_oik"] = jnp.stack(conv_w_oik)                        # (NL, 2H, H, K)
    p["conv_b"] = jnp.stack(conv_b)                                # (NL, 1, 2H)
    return p


if __name__ == "__main__":
    # Small config consistent with Encoder(__init__): input_dim=50, hid_dim=32,
    # n_layers=2, kernel_size=3, dropout (identity in eval), emb_dim=32.
    VOCAB, MAX_LEN, EMB, HID, NL, K = 50, 100, 32, 32, 2, 3
    B, L = 2, 8

    key = jax.random.PRNGKey(0)
    pkey, skey = jax.random.split(key)
    params = make_params(pkey, VOCAB, MAX_LEN, EMB, HID, NL, K)
    src = jax.random.randint(skey, (B, L), 0, VOCAB, dtype=jnp.int32)

    conved, combined = encoder_forward(src, params)
    conved = jax.block_until_ready(conved)
    combined = jax.block_until_ready(combined)

    ref_conved, ref_combined = encoder_reference(src, params)
    np.testing.assert_allclose(np.asarray(conved), np.asarray(ref_conved),
                               rtol=1e-4, atol=1e-4)
    np.testing.assert_allclose(np.asarray(combined), np.asarray(ref_combined),
                               rtol=1e-4, atol=1e-4)
    print("KERNEL_OK")
</pallas_src>

<mosaic_0001>
module attributes {stable_mosaic.version = 11 : i64} {
  func.func @encoder_kernel(%arg0: i32, %arg1: memref<16x128xf32, #tpu.memory_space<vmem>>, %arg2: memref<128x128xf32, #tpu.memory_space<vmem>>, %arg3: memref<1x128xf32, #tpu.memory_space<vmem>>, %arg4: memref<1x384x128xf32, #tpu.memory_space<vmem>>, %arg5: memref<1x1x128xf32, #tpu.memory_space<vmem>>, %arg6: memref<1x384x128xf32, #tpu.memory_space<vmem>>, %arg7: memref<1x1x128xf32, #tpu.memory_space<vmem>>, %arg8: memref<128x128xf32, #tpu.memory_space<vmem>>, %arg9: memref<1x128xf32, #tpu.memory_space<vmem>>, %arg10: memref<16x128xf32, #tpu.memory_space<vmem>>, %arg11: memref<16x128xf32, #tpu.memory_space<vmem>>, %arg12: memref<2x10x128xf32, #tpu.memory_space<vmem>>) attributes {dimension_semantics = [#tpu.dimension_semantics<arbitrary>], iteration_bounds = array<i64: 2>, scalar_prefetch = 0 : i64, scratch_operands = 1 : i64, tpu.core_type = #tpu.core_type<tc>, window_params = [{pipeline_mode = #tpu.pipeline_mode<synchronous>, transform_indices = @transform_0, window_bounds = array<i64: 16, 128>}, {pipeline_mode = #tpu.pipeline_mode<synchronous>, transform_indices = @transform_1, window_bounds = array<i64: 128, 128>}, {pipeline_mode = #tpu.pipeline_mode<synchronous>, transform_indices = @transform_2, window_bounds = array<i64: 1, 128>}, {transform_indices = @transform_3, window_bounds = array<i64: 1, 384, 128>}, {transform_indices = @transform_4, window_bounds = array<i64: 1, 1, 128>}, {transform_indices = @transform_5, window_bounds = array<i64: 1, 384, 128>}, {transform_indices = @transform_6, window_bounds = array<i64: 1, 1, 128>}, {pipeline_mode = #tpu.pipeline_mode<synchronous>, transform_indices = @transform_7, window_bounds = array<i64: 128, 128>}, {pipeline_mode = #tpu.pipeline_mode<synchronous>, transform_indices = @transform_8, window_bounds = array<i64: 1, 128>}, {pipeline_mode = #tpu.pipeline_mode<synchronous>, transform_indices = @transform_9, window_bounds = array<i64: 16, 128>}, {pipeline_mode = #tpu.pipeline_mode<synchronous>, transform_indices = @transform_10, window_bounds = array<i64: 16, 128>}]} {
    %c0_i32 = arith.constant 0 : i32
    %0 = arith.cmpi eq, %arg0, %c0_i32 : i32
    %1 = arith.extui %0 : i1 to i32
    %c0_i32_0 = arith.constant 0 : i32
    %2 = arith.cmpi ne, %1, %c0_i32_0 : i32
    scf.if %2 {
      %cst_27 = arith.constant 0.000000e+00 : f32
      %37 = vector.broadcast %cst_27 : f32 to vector<2x10x128xf32>
      %c0_28 = arith.constant 0 : index
      %c0_29 = arith.constant 0 : index
      %c0_30 = arith.constant 0 : index
      %38 = vector.load %arg12[%c0_28, %c0_29, %c0_30] : memref<2x10x128xf32, #tpu.memory_space<vmem>>, vector<2x10x128xf32>
      tpu.vector_store %arg12[%c0_28, %c0_29, %c0_30], %37 {strides = array<i32>} : memref<2x10x128xf32, #tpu.memory_space<vmem>>, vector<2x10x128xf32>,
      %c0_31 = arith.constant 0 : index
      %c0_32 = arith.constant 0 : index
      %39 = vector.load %arg1[%c0_31, %c0_32] : memref<16x128xf32, #tpu.memory_space<vmem>>, vector<16x128xf32>
      %c0_33 = arith.constant 0 : index
      %c0_34 = arith.constant 0 : index
      %40 = vector.load %arg2[%c0_33, %c0_34] : memref<128x128xf32, #tpu.memory_space<vmem>>, vector<128x128xf32>
      %cst_35 = arith.constant dense<0.000000e+00> : vector<16x128xf32>
      %41 = tpu.matmul %39, %40, %cst_35 {dimension_numbers = #tpu.dot_dimension_numbers<[1], [0], [0], [1], [0, 0, 1, 1], [], []>} : vector<16x128xf32>, vector<128x128xf32>, vector<16x128xf32> -> vector<16x128xf32>
      %c0_36 = arith.constant 0 : index
      %c0_37 = arith.constant 0 : index
      %42 = vector.load %arg3[%c0_36, %c0_37] : memref<1x128xf32, #tpu.memory_space<vmem>>, vector<1x128xf32>
      %43 = vector.broadcast %42 : vector<1x128xf32> to vector<16x128xf32>
      %44 = arith.addf %41, %43 : vector<16x128xf32>
      %45 = vector.shape_cast %44 : vector<16x128xf32> to vector<2x8x128xf32>
      %c0_38 = arith.constant 0 : index
      %c1_39 = arith.constant 1 : index
      %c0_40 = arith.constant 0 : index
      %46 = vector.load %arg12[%c0_38, %c1_39, %c0_40] : memref<2x10x128xf32, #tpu.memory_space<vmem>>, vector<2x8x128xf32>
      tpu.vector_store %arg12[%c0_38, %c1_39, %c0_40], %45 {strides = array<i32>} : memref<2x10x128xf32, #tpu.memory_space<vmem>>, vector<2x8x128xf32>,
    } else {
    }
    %c0 = arith.constant 0 : index
    %c0_1 = arith.constant 0 : index
    %c0_2 = arith.constant 0 : index
    %3 = vector.load %arg12[%c0, %c0_1, %c0_2] : memref<2x10x128xf32, #tpu.memory_space<vmem>>, vector<2x8x128xf32>
    %c0_3 = arith.constant 0 : index
    %c1 = arith.constant 1 : index
    %c0_4 = arith.constant 0 : index
    %4 = vector.load %arg12[%c0_3, %c1, %c0_4] : memref<2x10x128xf32, #tpu.memory_space<vmem>>, vector<2x8x128xf32>
    %c0_5 = arith.constant 0 : index
    %c2 = arith.constant 2 : index
    %c0_6 = arith.constant 0 : index
    %5 = vector.load %arg12[%c0_5, %c2, %c0_6] : memref<2x10x128xf32, #tpu.memory_space<vmem>>, vector<2x8x128xf32>
    %6 = tpu.concatenate %3, %4, %5 in 2 : vector<2x8x128xf32>, vector<2x8x128xf32>, vector<2x8x128xf32> -> vector<2x8x384xf32>
    %7 = vector.shape_cast %6 : vector<2x8x384xf32> to vector<16x384xf32>
    %8 = vector.shape_cast %4 : vector<2x8x128xf32> to vector<16x128xf32>
    %c0_7 = arith.constant 0 : index
    %c0_8 = arith.constant 0 : index
    %c0_9 = arith.constant 0 : index
    %9 = vector.load %arg4[%c0_7, %c0_8, %c0_9] : memref<1x384x128xf32, #tpu.memory_space<vmem>>, vector<1x384x128xf32>
    %10 = vector.shape_cast %9 : vector<1x384x128xf32> to vector<384x128xf32>
    %cst = arith.constant dense<0.000000e+00> : vector<16x128xf32>
    %11 = tpu.matmul %7, %10, %cst {dimension_numbers = #tpu.dot_dimension_numbers<[1], [0], [0], [1], [0, 0, 1, 1], [], []>} : vector<16x384xf32>, vector<384x128xf32>, vector<16x128xf32> -> vector<16x128xf32>
    %c0_10 = arith.constant 0 : index
    %c0_11 = arith.constant 0 : index
    %c0_12 = arith.constant 0 : index
    %12 = vector.load %arg5[%c0_10, %c0_11, %c0_12] : memref<1x1x128xf32, #tpu.memory_space<vmem>>, vector<1x1x128xf32>
    %13 = vector.shape_cast %12 : vector<1x1x128xf32> to vector<1x128xf32>
    %14 = vector.broadcast %13 : vector<1x128xf32> to vector<16x128xf32>
    %15 = arith.addf %11, %14 : vector<16x128xf32>
    %c0_13 = arith.constant 0 : index
    %c0_14 = arith.constant 0 : index
    %c0_15 = arith.constant 0 : index
    %16 = vector.load %arg6[%c0_13, %c0_14, %c0_15] : memref<1x384x128xf32, #tpu.memory_space<vmem>>, vector<1x384x128xf32>
    %17 = vector.shape_cast %16 : vector<1x384x128xf32> to vector<384x128xf32>
    %cst_16 = arith.constant dense<0.000000e+00> : vector<16x128xf32>
    %18 = tpu.matmul %7, %17, %cst_16 {dimension_numbers = #tpu.dot_dimension_numbers<[1], [0], [0], [1], [0, 0, 1, 1], [], []>} : vector<16x384xf32>, vector<384x128xf32>, vector<16x128xf32> -> vector<16x128xf32>
    %c0_17 = arith.constant 0 : index
    %c0_18 = arith.constant 0 : index
    %c0_19 = arith.constant 0 : index
    %19 = vector.load %arg7[%c0_17, %c0_18, %c0_19] : memref<1x1x128xf32, #tpu.memory_space<vmem>>, vector<1x1x128xf32>
    %20 = vector.shape_cast %19 : vector<1x1x128xf32> to vector<1x128xf32>
    %21 = vector.broadcast %20 : vector<1x128xf32> to vector<16x128xf32>
    %22 = arith.addf %18, %21 : vector<16x128xf32>
    %23 = arith.negf %22 : vector<16x128xf32>
    %24 = math.exp %23 : vector<16x128xf32>
    %cst_20 = arith.constant 1.000000e+00 : f32
    %25 = vector.broadcast %cst_20 : f32 to vector<16x128xf32>
    %26 = arith.addf %25, %24 : vector<16x128xf32>
    %27 = arith.divf %25, %26 : vector<16x128xf32>
    %28 = arith.mulf %15, %27 : vector<16x128xf32>
    %29 = arith.addf %28, %8 : vector<16x128xf32>
    %cst_21 = arith.constant 0.707106769 : f32
    %30 = vector.broadcast %cst_21 : f32 to vector<16x128xf32>
    %31 = arith.mulf %29, %30 : vector<16x128xf32>
    %32 = vector.shape_cast %31 : vector<16x128xf32> to vector<2x8x128xf32>
    %c0_22 = arith.constant 0 : index
    %c1_23 = arith.constant 1 : index
    %c0_24 = arith.constant 0 : index
    %33 = vector.load %arg12[%c0_22, %c1_23, %c0_24] : memref<2x10x128xf32, #tpu.memory_space<vmem>>, vector<2x8x128xf32>
    tpu.vector_store %arg12[%c0_22, %c1_23, %c0_24], %32 {strides = array<i32>} : memref<2x10x128xf32, #tpu.memory_space<vmem>>, vector<2x8x128xf32>,
    %c1_i32 = arith.constant 1 : i32
    %34 = arith.cmpi eq, %arg0, %c1_i32 : i32
    %35 = arith.extui %34 : i1 to i32
    %cst_25 = arith.constant 0.707106769 : f32
    %c0_i32_26 = arith.constant 0 : i32
    %36 = arith.cmpi ne, %35, %c0_i32_26 : i32
    scf.if %36 {
      %c0_27 = arith.constant 0 : index
      %c1_28 = arith.constant 1 : index
      %c0_29 = arith.constant 0 : index
      %37 = vector.load %arg12[%c0_27, %c1_28, %c0_29] : memref<2x10x128xf32, #tpu.memory_space<vmem>>, vector<2x8x128xf32>
      %38 = vector.shape_cast %37 : vector<2x8x128xf32> to vector<16x128xf32>
      %c0_30 = arith.constant 0 : index
      %c0_31 = arith.constant 0 : index
      %39 = vector.load %arg8[%c0_30, %c0_31] : memref<128x128xf32, #tpu.memory_space<vmem>>, vector<128x128xf32>
      %cst_32 = arith.constant dense<0.000000e+00> : vector<16x128xf32>
      %40 = tpu.matmul %38, %39, %cst_32 {dimension_numbers = #tpu.dot_dimension_numbers<[1], [0], [0], [1], [0, 0, 1, 1], [], []>} : vector<16x128xf32>, vector<128x128xf32>, vector<16x128xf32> -> vector<16x128xf32>
      %c0_33 = arith.constant 0 : index
      %c0_34 = arith.constant 0 : index
      %41 = vector.load %arg9[%c0_33, %c0_34] : memref<1x128xf32, #tpu.memory_space<vmem>>, vector<1x128xf32>
      %42 = vector.broadcast %41 : vector<1x128xf32> to vector<16x128xf32>
      %43 = arith.addf %40, %42 : vector<16x128xf32>
      %c0_35 = arith.constant 0 : index
      %c0_36 = arith.constant 0 : index
      %44 = vector.load %arg10[%c0_35, %c0_36] : memref<16x128xf32, #tpu.memory_space<vmem>>, vector<16x128xf32>
      tpu.vector_store %arg10[%c0_35, %c0_36], %43 {strides = array<i32>} : memref<16x128xf32, #tpu.memory_space<vmem>>, vector<16x128xf32>,
      %c0_37 = arith.constant 0 : index
      %c0_38 = arith.constant 0 : index
      %45 = vector.load %arg1[%c0_37, %c0_38] : memref<16x128xf32, #tpu.memory_space<vmem>>, vector<16x128xf32>
      %46 = arith.addf %43, %45 : vector<16x128xf32>
      %47 = vector.broadcast %cst_25 : f32 to vector<16x128xf32>
      %48 = arith.mulf %46, %47 : vector<16x128xf32>
      %c0_39 = arith.constant 0 : index
      %c0_40 = arith.constant 0 : index
      %49 = vector.load %arg11[%c0_39, %c0_40] : memref<16x128xf32, #tpu.memory_space<vmem>>, vector<16x128xf32>
      tpu.vector_store %arg11[%c0_39, %c0_40], %48 {strides = array<i32>} : memref<16x128xf32, #tpu.memory_space<vmem>>, vector<16x128xf32>,
    } else {
    }
    return
  }
  func.func @transform_0(%arg0: i32) -> (i32, i32) {
    %c0_i32 = arith.constant 0 : i32
    %c0_i32_0 = arith.constant 0 : i32
    %c0_i32_1 = arith.constant 0 : i32
    return %c0_i32, %c0_i32_0 : i32, i32
  }
  func.func @transform_1(%arg0: i32) -> (i32, i32) {
    %c0_i32 = arith.constant 0 : i32
    %c0_i32_0 = arith.constant 0 : i32
    %c0_i32_1 = arith.constant 0 : i32
    return %c0_i32, %c0_i32_0 : i32, i32
  }
  func.func @transform_2(%arg0: i32) -> (i32, i32) {
    %c0_i32 = arith.constant 0 : i32
    %c0_i32_0 = arith.constant 0 : i32
    %c0_i32_1 = arith.constant 0 : i32
    return %c0_i32, %c0_i32_0 : i32, i32
  }
  func.func @transform_3(%arg0: i32) -> (i32, i32, i32) {
    %c0_i32 = arith.constant 0 : i32
    %c0_i32_0 = arith.constant 0 : i32
    %c0_i32_1 = arith.constant 0 : i32
    return %arg0, %c0_i32, %c0_i32_0 : i32, i32, i32
  }
  func.func @transform_4(%arg0: i32) -> (i32, i32, i32) {
    %c0_i32 = arith.constant 0 : i32
    %c0_i32_0 = arith.constant 0 : i32
    %c0_i32_1 = arith.constant 0 : i32
    return %arg0, %c0_i32, %c0_i32_0 : i32, i32, i32
  }
  func.func @transform_5(%arg0: i32) -> (i32, i32, i32) {
    %c0_i32 = arith.constant 0 : i32
    %c0_i32_0 = arith.constant 0 : i32
    %c0_i32_1 = arith.constant 0 : i32
    return %arg0, %c0_i32, %c0_i32_0 : i32, i32, i32
  }
  func.func @transform_6(%arg0: i32) -> (i32, i32, i32) {
    %c0_i32 = arith.constant 0 : i32
    %c0_i32_0 = arith.constant 0 : i32
    %c0_i32_1 = arith.constant 0 : i32
    return %arg0, %c0_i32, %c0_i32_0 : i32, i32, i32
  }
  func.func @transform_7(%arg0: i32) -> (i32, i32) {
    %c0_i32 = arith.constant 0 : i32
    %c0_i32_0 = arith.constant 0 : i32
    %c0_i32_1 = arith.constant 0 : i32
    return %c0_i32, %c0_i32_0 : i32, i32
  }
  func.func @transform_8(%arg0: i32) -> (i32, i32) {
    %c0_i32 = arith.constant 0 : i32
    %c0_i32_0 = arith.constant 0 : i32
    %c0_i32_1 = arith.constant 0 : i32
    return %c0_i32, %c0_i32_0 : i32, i32
  }
  func.func @transform_9(%arg0: i32) -> (i32, i32) {
    %c0_i32 = arith.constant 0 : i32
    %c0_i32_0 = arith.constant 0 : i32
    %c0_i32_1 = arith.constant 0 : i32
    return %c0_i32, %c0_i32_0 : i32, i32
  }
  func.func @transform_10(%arg0: i32) -> (i32, i32) {
    %c0_i32 = arith.constant 0 : i32
    %c0_i32_0 = arith.constant 0 : i32
    %c0_i32_1 = arith.constant 0 : i32
    return %c0_i32, %c0_i32_0 : i32, i32
  }
}

</mosaic_0001>

<llo_original>
// kernel: tpu_custom_call.1
$region0: #{tpu_custom_call.1}
  #allocation0 [shape = 'u32[]', space=smem, size = 0x4, offset = 0x4, fixed_abs, tag = 'smem constant byte address 0x4 - core index']
  #allocation1 [shape = 'u32[144,128]{1,0:T(1,128)}', space=vmem, size = 0x12000, scoped, tag = 'internal scratch']
  #allocation2 [shape = 'f32[2,10,128]{2,1,0:T(8,128)}', space=vmem, size = 0x4000, scoped, tag = 'scratch operand']
  %s0 = inlined_call_operand.hbm [shape: f32[16,128], index: 0, kind: input, shape index: {}]
  %s1 = inlined_call_operand.hbm [shape: f32[128,128], index: 1, kind: input, shape index: {}]
  %s2 = inlined_call_operand.vmem [shape: f32[1,128], index: 2, kind: input, shape index: {}]
  %s3 = inlined_call_operand.hbm [shape: f32[2,384,128], index: 3, kind: input, shape index: {}]
  %s4 = inlined_call_operand.vmem [shape: f32[2,1,128], index: 4, kind: input, shape index: {}]
  %s5 = inlined_call_operand.hbm [shape: f32[2,384,128], index: 5, kind: input, shape index: {}]
  %s6 = inlined_call_operand.vmem [shape: f32[2,1,128], index: 6, kind: input, shape index: {}]
  %s7 = inlined_call_operand.hbm [shape: f32[128,128], index: 7, kind: input, shape index: {}]
  %s8 = inlined_call_operand.vmem [shape: f32[1,128], index: 8, kind: input, shape index: {}]
  %s9 = inlined_call_operand.hbm [shape: f32[16,128], index: 9, kind: output, shape index: {0}]
  %s10 = inlined_call_operand.hbm [shape: f32[16,128], index: 10, kind: output, shape index: {1}]
  %11 = xla_tuple %s9, %s10
  %s12 = sld [smem:[#allocation0]]
  $region105: #{tpu_custom_call.1} parent=0
    _
  %s14 = ssub.s32 1, %s12
  %s15 = scalar_select 0, %s14, %s12
  $region1: #{tpu_custom_call.1} parent=0
    #allocation3 [shape = 'u8[8192]{0}', space=vmem, size = 0x2000, scoped, tag = 'input window, operand 0, single buffered']
    #allocation4 [shape = 's32[2]{0}', space=sflag, size = 0x8, scoped, tag = 'scoped memory for tpu_custom_call.1']
    #allocation5 [shape = 's32[2]{0}', space=sflag, size = 0x8, scoped, tag = 'scoped memory for tpu_custom_call.1']
    #allocation6 [shape = 'u8[65536]{0}', space=vmem, size = 0x10000, scoped, tag = 'input window, operand 1, single buffered']
    #allocation7 [shape = 's32[1]{0}', space=sflag, size = 0x4, scoped, tag = 'scoped memory for tpu_custom_call.1']
    #allocation8 [shape = 'u8[393216]{0}', space=vmem, size = 0x60000, scoped, tag = 'input window, operand 3']
    #allocation9 [shape = 'u8[393216]{0}', space=vmem, size = 0x60000, scoped, tag = 'input window, operand 5']
    #allocation10 [shape = 'u8[65536]{0}', space=vmem, size = 0x10000, scoped, tag = 'input window, operand 7, single buffered']
    #allocation11 [shape = 'u8[8192]{0}', space=vmem, size = 0x2000, scoped, tag = 'output window, operand 0, single buffered']
    #allocation12 [shape = 'u8[8192]{0}', space=vmem, size = 0x2000, scoped, tag = 'output window, operand 1, single buffered']
    #allocation13 [shape = 's32[1]{0}', space=sflag, size = 0x4, scoped, tag = 'scoped memory for tpu_custom_call.1']
    %16 = vsyncpa [#allocation4], 0
    %17 = vsyncpa [#allocation7], 0
    %18 = vsyncpa [#allocation5], 0
    %19 = vsyncpa [#allocation13], 0
    loop: start=0, step=1, limit=4
    $region2: #{tpu_custom_call.1} parent=1 // loop_pre_header
      _
    $region3: #{tpu_custom_call.1} parent=1 // loop_header
      %s21 = sphi 0, %s25
      %p22 = scmp.ge.s32.totalorder %s21, 4
      %s29 = sphi 0, %s29
      %s31 = sphi 0, %s29
      %s32 = sphi 0, %s31
      %s46 = sphi 0, %s32
      %s50 = sphi 0, %s50
      %s52 = sphi 0, %s50
      %s53 = sphi 0, %s52
      %s67 = sphi 0, %s53
      %s71 = sphi 0, %s71
      %s73 = sphi 0, %s71
      %s74 = sphi 0, %s73
      %s88 = sphi 0, %s74
      %s94 = sphi 0, %s96
      %s97 = sphi 0, %s94
      %s98 = sphi 0, %s97
      %s114 = sphi 0, %s98
      %s120 = sphi 0, %s122
      %s123 = sphi 0, %s120
      %s124 = sphi 0, %s123
      %s140 = sphi 0, %s124
      %s146 = sphi 0, %s148
      %s149 = sphi 0, %s146
      %s150 = sphi 0, %s149
      %s166 = sphi 0, %s150
      %s172 = sphi 0, %s174
      %s175 = sphi 0, %s172
      %s176 = sphi 0, %s175
      %s192 = sphi 0, %s176
      %s196 = sphi 0, %s196
      %s198 = sphi 0, %s196
      %s199 = sphi 0, %s198
      %s213 = sphi 0, %s199
      %s217 = sphi 0, %s217
      %s219 = sphi 0, %s217
      %s220 = sphi 0, %s219
      %s234 = sphi 0, %s220
      %s238 = sphi 0, %s238
      %s240 = sphi 0, %s238
      %s241 = sphi 0, %s240
      %s255 = sphi 0, %s241
      %s259 = sphi 0, %s259
      %s261 = sphi 0, %s259
      %s262 = sphi 0, %s261
      %s276 = sphi 0, %s262
    $region4: #{tpu_custom_call.1} parent=1 // loop_header_branch
      %24 = sbr.rel (%p22) target = $region8
    $region5: #{tpu_custom_call.1} parent=1 // loop_body
      %s26 = ssub.s32 %s21, 1
      %s27 = ssub.s32 %s21, 2
      %s28 = sadd.s32 %s21, 1
      %s30 = sadd.s32 %s29, 1
      %p33 = scmp.eq.s32.totalorder %s21, 1
      %p34 = scmp.ne.s32.totalorder %s29, %s31
      %p35 = scmp.eq.s32.totalorder %s21, 0
      %p36 = por %p34, %p35
      %p37 = scmp.ne.s32.totalorder %s29, %s31
      %p38 = scmp.eq.s32.totalorder %s26, 1
      %p39 = por %p37, %p38
      %p40 = scmp.ne.s32.totalorder %s31, %s32
      %p41 = scmp.eq.s32.totalorder %s26, 0
      %p42 = por %p40, %p41
      %p43 = scmp.ne.s32.totalorder %s31, %s32
      %p44 = scmp.eq.s32.totalorder %s27, 1
      %p45 = por %p43, %p44
      %p47 = scmp.ne.s32.totalorder %s32, %s46
      %p48 = scmp.eq.s32.totalorder %s27, 0
      %p49 = por %p47, %p48
      %s51 = sadd.s32 %s50, 1
      %p54 = scmp.eq.s32.totalorder %s21, 1
      %p55 = scmp.ne.s32.totalorder %s50, %s52
      %p56 = scmp.eq.s32.totalorder %s21, 0
      %p57 = por %p55, %p56
      %p58 = scmp.ne.s32.totalorder %s50, %s52
      %p59 = scmp.eq.s32.totalorder %s26, 1
      %p60 = por %p58, %p59
      %p61 = scmp.ne.s32.totalorder %s52, %s53
      %p62 = scmp.eq.s32.totalorder %s26, 0
      %p63 = por %p61, %p62
      %p64 = scmp.ne.s32.totalorder %s52, %s53
      %p65 = scmp.eq.s32.totalorder %s27, 1
      %p66 = por %p64, %p65
      %p68 = scmp.ne.s32.totalorder %s53, %s67
      %p69 = scmp.eq.s32.totalorder %s27, 0
      %p70 = por %p68, %p69
      %s72 = sadd.s32 %s71, 1
      %p75 = scmp.eq.s32.totalorder %s21, 1
      %p76 = scmp.ne.s32.totalorder %s71, %s73
      %p77 = scmp.eq.s32.totalorder %s21, 0
      %p78 = por %p76, %p77
      %p79 = scmp.ne.s32.totalorder %s71, %s73
      %p80 = scmp.eq.s32.totalorder %s26, 1
      %p81 = por %p79, %p80
      %p82 = scmp.ne.s32.totalorder %s73, %s74
      %p83 = scmp.eq.s32.totalorder %s26, 0
      %p84 = por %p82, %p83
      %p85 = scmp.ne.s32.totalorder %s73, %s74
      %p86 = scmp.eq.s32.totalorder %s27, 1
      %p87 = por %p85, %p86
      %p89 = scmp.ne.s32.totalorder %s74, %s88
      %p90 = scmp.eq.s32.totalorder %s27, 0
      %p91 = por %p89, %p90
      %s92 = ssub.s32 %s21, %s28
      %p93 = scmp.eq.s32.totalorder %s92, 0
      %s95 = sadd.s32 %s94, 1
      %s96 = scalar_select %p93, %s94, %s95
      %p99 = pneg %p93
      %p100 = scmp.eq.s32.totalorder %s21, 1
      %p101 = por %p99, %p100
      %p102 = scmp.ne.s32.totalorder %s94, %s97
      %p103 = scmp.eq.s32.totalorder %s21, 0
      %p104 = por %p102, %p103
      %p105 = scmp.ne.s32.totalorder %s94, %s97
      %p106 = scmp.eq.s32.totalorder %s26, 1
      %p107 = por %p105, %p106
      %p108 = scmp.ne.s32.totalorder %s97, %s98
      %p109 = scmp.eq.s32.totalorder %s26, 0
      %p110 = por %p108, %p109
      %p111 = scmp.ne.s32.totalorder %s97, %s98
      %p112 = scmp.eq.s32.totalorder %s27, 1
      %p113 = por %p111, %p112
      %p115 = scmp.ne.s32.totalorder %s98, %s114
      %p116 = scmp.eq.s32.totalorder %s27, 0
      %p117 = por %p115, %p116
      %s118 = ssub.s32 %s21, %s28
      %p119 = scmp.eq.s32.totalorder %s118, 0
      %s121 = sadd.s32 %s120, 1
      %s122 = scalar_select %p119, %s120, %s121
      %p125 = pneg %p119
      %p126 = scmp.eq.s32.totalorder %s21, 1
      %p127 = por %p125, %p126
      %p128 = scmp.ne.s32.totalorder %s120, %s123
      %p129 = scmp.eq.s32.totalorder %s21, 0
      %p130 = por %p128, %p129
      %p131 = scmp.ne.s32.totalorder %s120, %s123
      %p132 = scmp.eq.s32.totalorder %s26, 1
      %p133 = por %p131, %p132
      %p134 = scmp.ne.s32.totalorder %s123, %s124
      %p135 = scmp.eq.s32.totalorder %s26, 0
      %p136 = por %p134, %p135
      %p137 = scmp.ne.s32.totalorder %s123, %s124
      %p138 = scmp.eq.s32.totalorder %s27, 1
      %p139 = por %p137, %p138
      %p141 = scmp.ne.s32.totalorder %s124, %s140
      %p142 = scmp.eq.s32.totalorder %s27, 0
      %p143 = por %p141, %p142
      %s144 = ssub.s32 %s21, %s28
      %p145 = scmp.eq.s32.totalorder %s144, 0
      %s147 = sadd.s32 %s146, 1
      %s148 = scalar_select %p145, %s146, %s147
      %p151 = pneg %p145
      %p152 = scmp.eq.s32.totalorder %s21, 1
      %p153 = por %p151, %p152
      %p154 = scmp.ne.s32.totalorder %s146, %s149
      %p155 = scmp.eq.s32.totalorder %s21, 0
      %p156 = por %p154, %p155
      %p157 = scmp.ne.s32.totalorder %s146, %s149
      %p158 = scmp.eq.s32.totalorder %s26, 1
      %p159 = por %p157, %p158
      %p160 = scmp.ne.s32.totalorder %s149, %s150
      %p161 = scmp.eq.s32.totalorder %s26, 0
      %p162 = por %p160, %p161
      %p163 = scmp.ne.s32.totalorder %s149, %s150
      %p164 = scmp.eq.s32.totalorder %s27, 1
      %p165 = por %p163, %p164
      %p167 = scmp.ne.s32.totalorder %s150, %s166
      %p168 = scmp.eq.s32.totalorder %s27, 0
      %p169 = por %p167, %p168
      %s170 = ssub.s32 %s21, %s28
      %p171 = scmp.eq.s32.totalorder %s170, 0
      %s173 = sadd.s32 %s172, 1
      %s174 = scalar_select %p171, %s172, %s173
      %p177 = pneg %p171
      %p178 = scmp.eq.s32.totalorder %s21, 1
      %p179 = por %p177, %p178
      %p180 = scmp.ne.s32.totalorder %s172, %s175
      %p181 = scmp.eq.s32.totalorder %s21, 0
      %p182 = por %p180, %p181
      %p183 = scmp.ne.s32.totalorder %s172, %s175
      %p184 = scmp.eq.s32.totalorder %s26, 1
      %p185 = por %p183, %p184
      %p186 = scmp.ne.s32.totalorder %s175, %s176
      %p187 = scmp.eq.s32.totalorder %s26, 0
      %p188 = por %p186, %p187
      %p189 = scmp.ne.s32.totalorder %s175, %s176
      %p190 = scmp.eq.s32.totalorder %s27, 1
      %p191 = por %p189, %p190
      %p193 = scmp.ne.s32.totalorder %s176, %s192
      %p194 = scmp.eq.s32.totalorder %s27, 0
      %p195 = por %p193, %p194
      %s197 = sadd.s32 %s196, 1
      %p200 = scmp.eq.s32.totalorder %s21, 1
      %p201 = scmp.ne.s32.totalorder %s196, %s198
      %p202 = scmp.eq.s32.totalorder %s21, 0
      %p203 = por %p201, %p202
      %p204 = scmp.ne.s32.totalorder %s196, %s198
      %p205 = scmp.eq.s32.totalorder %s26, 1
      %p206 = por %p204, %p205
      %p207 = scmp.ne.s32.totalorder %s198, %s199
      %p208 = scmp.eq.s32.totalorder %s26, 0
      %p209 = por %p207, %p208
      %p210 = scmp.ne.s32.totalorder %s198, %s199
      %p211 = scmp.eq.s32.totalorder %s27, 1
      %p212 = por %p210, %p211
      %p214 = scmp.ne.s32.totalorder %s199, %s213
      %p215 = scmp.eq.s32.totalorder %s27, 0
      %p216 = por %p214, %p215
      %s218 = sadd.s32 %s217, 1
      %p221 = scmp.eq.s32.totalorder %s21, 1
      %p222 = scmp.ne.s32.totalorder %s217, %s219
      %p223 = scmp.eq.s32.totalorder %s21, 0
      %p224 = por %p222, %p223
      %p225 = scmp.ne.s32.totalorder %s217, %s219
      %p226 = scmp.eq.s32.totalorder %s26, 1
      %p227 = por %p225, %p226
      %p228 = scmp.ne.s32.totalorder %s219, %s220
      %p229 = scmp.eq.s32.totalorder %s26, 0
      %p230 = por %p228, %p229
      %p231 = scmp.ne.s32.totalorder %s219, %s220
      %p232 = scmp.eq.s32.totalorder %s27, 1
      %p233 = por %p231, %p232
      %p235 = scmp.ne.s32.totalorder %s220, %s234
      %p236 = scmp.eq.s32.totalorder %s27, 0
      %p237 = por %p235, %p236
      %s239 = sadd.s32 %s238, 1
      %p242 = scmp.eq.s32.totalorder %s21, 1
      %p243 = scmp.ne.s32.totalorder %s238, %s240
      %p244 = scmp.eq.s32.totalorder %s21, 0
      %p245 = por %p243, %p244
      %p246 = scmp.ne.s32.totalorder %s238, %s240
      %p247 = scmp.eq.s32.totalorder %s26, 1
      %p248 = por %p246, %p247
      %p249 = scmp.ne.s32.totalorder %s240, %s241
      %p250 = scmp.eq.s32.totalorder %s26, 0
      %p251 = por %p249, %p250
      %p252 = scmp.ne.s32.totalorder %s240, %s241
      %p253 = scmp.eq.s32.totalorder %s27, 1
      %p254 = por %p252, %p253
      %p256 = scmp.ne.s32.totalorder %s241, %s255
      %p257 = scmp.eq.s32.totalorder %s27, 0
      %p258 = por %p256, %p257
      %s260 = sadd.s32 %s259, 1
      %p263 = scmp.eq.s32.totalorder %s21, 1
      %p264 = scmp.ne.s32.totalorder %s259, %s261
      %p265 = scmp.eq.s32.totalorder %s21, 0
      %p266 = por %p264, %p265
      %p267 = scmp.ne.s32.totalorder %s259, %s261
      %p268 = scmp.eq.s32.totalorder %s26, 1
      %p269 = por %p267, %p268
      %p270 = scmp.ne.s32.totalorder %s261, %s262
      %p271 = scmp.eq.s32.totalorder %s26, 0
      %p272 = por %p270, %p271
      %p273 = scmp.ne.s32.totalorder %s261, %s262
      %p274 = scmp.eq.s32.totalorder %s27, 1
      %p275 = por %p273, %p274
      %p277 = scmp.ne.s32.totalorder %s262, %s276
      %p278 = scmp.eq.s32.totalorder %s27, 0
      %p279 = por %p277, %p278
      %p280 = scmp.le.s32.totalorder 1, %s21
      %p281 = scmp.lt.s32.totalorder %s21, 3
      %p282 = pnand %p280, %p281
      %p283 = pneg %p282
      // Predicated region
      $region9: #{tpu_custom_call.1} parent=5 // pred_check
        _
      $region10: #{tpu_custom_call.1} parent=5 // pred_check_branch
        %285 = sbr.rel (%p282) target = $region12
      $region11: #{tpu_custom_call.1} parent=5 // pred_region
        %s286 = ssub.s32 %s21, 1
        // Predicated region
        $region13: #{tpu_custom_call.1} parent=11 // pred_check
          %p287 = pneg %p42
        $region14: #{tpu_custom_call.1} parent=11 // pred_check_branch
          %289 = sbr.rel (%p287) target = $region16
        $region15: #{tpu_custom_call.1} parent=11 // pred_region
          %s291 = ssub.s32 256, 256
          %292 = vsyncadd [#allocation4], %s291
          %s293 = sshll.u32 [#allocation3], 4
          %s294 = int_to_ptr.vmem [resolvable:$true] %s293
          %299 = dma.hbm_to_vmem [thread:$0]  %s0, 256, %s294, [#allocation4], 128, 128, 8
        $region16: #{tpu_custom_call.1} parent=11 // pred_fallthru
          _
        // Predicated region
        $region17: #{tpu_custom_call.1} parent=11 // pred_check
          %p300 = pneg %p63
        $region18: #{tpu_custom_call.1} parent=11 // pred_check_branch
          %302 = sbr.rel (%p300) target = $region20
        $region19: #{tpu_custom_call.1} parent=11 // pred_region
          %s304 = ssub.s32 2048, 2048
          %305 = vsyncadd [#allocation7], %s304
          %s306 = sshll.u32 [#allocation6], 4
          %s307 = int_to_ptr.vmem [resolvable:$true] %s306
          %312 = dma.hbm_to_vmem [thread:$0]  %s1, 2048, %s307, [#allocation7], 128, 128, 8
        $region20: #{tpu_custom_call.1} parent=11 // pred_fallthru
          _
        // Predicated region
        $region21: #{tpu_custom_call.1} parent=11 // pred_check
          %p313 = pneg %p84
        $region22: #{tpu_custom_call.1} parent=11 // pred_check_branch
          %315 = sbr.rel (%p313) target = $region24
        $region23: #{tpu_custom_call.1} parent=11 // pred_region
          _
        $region24: #{tpu_custom_call.1} parent=11 // pred_fallthru
          _
        // Predicated region
        $region25: #{tpu_custom_call.1} parent=11 // pred_check
          %p316 = pneg %p209
        $region26: #{tpu_custom_call.1} parent=11 // pred_check_branch
          %318 = sbr.rel (%p316) target = $region28
        $region27: #{tpu_custom_call.1} parent=11 // pred_region
          %s320 = ssub.s32 2048, 2048
          %321 = vsyncadd [#allocation7], %s320
          %s322 = sshll.u32 [#allocation10], 4
          %s323 = int_to_ptr.vmem [resolvable:$true] %s322
          %328 = dma.hbm_to_vmem [thread:$0]  %s7, 2048, %s323, [#allocation7], 128, 128, 8
        $region28: #{tpu_custom_call.1} parent=11 // pred_fallthru
          _
        // Predicated region
        $region29: #{tpu_custom_call.1} parent=11 // pred_check
          %p329 = pneg %p230
        $region30: #{tpu_custom_call.1} parent=11 // pred_check_branch
          %331 = sbr.rel (%p329) target = $region32
        $region31: #{tpu_custom_call.1} parent=11 // pred_region
          _
        $region32: #{tpu_custom_call.1} parent=11 // pred_fallthru
          _
      $region12: #{tpu_custom_call.1} parent=5 // pred_fallthru
        _
      %p332 = scmp.lt.s32.totalorder %s21, 2
      // Predicated region
      $region33: #{tpu_custom_call.1} parent=5 // pred_check
        %p333 = pneg %p332
      $region34: #{tpu_custom_call.1} parent=5 // pred_check_branch
        %335 = sbr.rel (%p333) target = $region36
      $region35: #{tpu_custom_call.1} parent=5 // pred_region
        // Predicated region
        $region37: #{tpu_custom_call.1} parent=35 // pred_check
          %p336 = pneg %p104
        $region38: #{tpu_custom_call.1} parent=35 // pred_check_branch
          %338 = sbr.rel (%p336) target = $region40
        $region39: #{tpu_custom_call.1} parent=35 // pred_region
          %s339 = sand.u32 %s21, 1
          %s340 = scalar_lea.sflag [#allocation4], %s339
          %s341 = sand.u32 %s94, 1
          %s342 = smul.addr %s341, 384
          %s343 = scalar_lea.vmem [#allocation8], %s342
          %s345 = ssub.s32 6144, 6144
          %346 = vsyncadd %s340, %s345
          %s347 = smul.addr %s21, 48
          %s348 = smul.addr %s347, 128
          %s349 = scalar_lea.hbm %s3, %s348
          %s350 = sshll.u32 %s343, 4
          %s351 = int_to_ptr.vmem [resolvable:$true] %s350
          %356 = dma.hbm_to_vmem [thread:$0]  %s349, 6144, %s351, %s340, 128, 128, 8
        $region40: #{tpu_custom_call.1} parent=35 // pred_fallthru
          _
        // Predicated region
        $region41: #{tpu_custom_call.1} parent=35 // pred_check
          %p357 = pneg %p130
        $region42: #{tpu_custom_call.1} parent=35 // pred_check_branch
          %359 = sbr.rel (%p357) target = $region44
        $region43: #{tpu_custom_call.1} parent=35 // pred_region
          %p360 = scmp.lt.s32.totalorder %s21, 1
          %s361 = scalar_select %p360, %s21, 1
          %s362 = scalar_lea.vmem %s4, %s361
        $region44: #{tpu_custom_call.1} parent=35 // pred_fallthru
          _
        // Predicated region
        $region45: #{tpu_custom_call.1} parent=35 // pred_check
          %p363 = pneg %p156
        $region46: #{tpu_custom_call.1} parent=35 // pred_check_branch
          %365 = sbr.rel (%p363) target = $region48
        $region47: #{tpu_custom_call.1} parent=35 // pred_region
          %s366 = sand.u32 %s21, 1
          %s367 = scalar_lea.sflag [#allocation4], %s366
          %s368 = sand.u32 %s146, 1
          %s369 = smul.addr %s368, 384
          %s370 = scalar_lea.vmem [#allocation9], %s369
          %s372 = ssub.s32 6144, 6144
          %373 = vsyncadd %s367, %s372
          %s374 = smul.addr %s21, 48
          %s375 = smul.addr %s374, 128
          %s376 = scalar_lea.hbm %s5, %s375
          %s377 = sshll.u32 %s370, 4
          %s378 = int_to_ptr.vmem [resolvable:$true] %s377
          %383 = dma.hbm_to_vmem [thread:$0]  %s376, 6144, %s378, %s367, 128, 128, 8
        $region48: #{tpu_custom_call.1} parent=35 // pred_fallthru
          _
        // Predicated region
        $region49: #{tpu_custom_call.1} parent=35 // pred_check
          %p384 = pneg %p182
        $region50: #{tpu_custom_call.1} parent=35 // pred_check_branch
          %386 = sbr.rel (%p384) target = $region52
        $region51: #{tpu_custom_call.1} parent=35 // pred_region
          %p387 = scmp.lt.s32.totalorder %s21, 1
          %s388 = scalar_select %p387, %s21, 1
          %s389 = scalar_lea.vmem %s6, %s388
        $region52: #{tpu_custom_call.1} parent=35 // pred_fallthru
          _
      $region36: #{tpu_custom_call.1} parent=5 // pred_fallthru
        _
      %p390 = scmp.le.s32.totalorder 1, %s21
      %p391 = scmp.lt.s32.totalorder %s21, 3
      %p392 = pnand %p390, %p391
      %p393 = pneg %p392
      // Predicated region
      $region53: #{tpu_custom_call.1} parent=5 // pred_check
        _
      $region54: #{tpu_custom_call.1} parent=5 // pred_check_branch
        %395 = sbr.rel (%p392) target = $region56
      $region55: #{tpu_custom_call.1} parent=5 // pred_region
        %s396 = ssub.s32 %s21, 1
        // Predicated region
        $region57: #{tpu_custom_call.1} parent=55 // pred_check
          %p397 = pneg %p42
        $region58: #{tpu_custom_call.1} parent=55 // pred_check_branch
          %399 = sbr.rel (%p397) target = $region60
        $region59: #{tpu_custom_call.1} parent=55 // pred_region
          %400 = dma.done [#allocation4], 256
        $region60: #{tpu_custom_call.1} parent=55 // pred_fallthru
          _
        // Predicated region
        $region61: #{tpu_custom_call.1} parent=55 // pred_check
          %p401 = pneg %p63
        $region62: #{tpu_custom_call.1} parent=55 // pred_check_branch
          %403 = sbr.rel (%p401) target = $region64
        $region63: #{tpu_custom_call.1} parent=55 // pred_region
          %404 = dma.done [#allocation7], 2048
        $region64: #{tpu_custom_call.1} parent=55 // pred_fallthru
          _
        %s405 = sand.u32 %s26, 1
        %s406 = scalar_lea.sflag [#allocation4], %s405
        %s407 = sand.u32 %s97, 1
        %s408 = smul.addr %s407, 384
        %s409 = scalar_lea.vmem [#allocation8], %s408
        // Predicated region
        $region65: #{tpu_custom_call.1} parent=55 // pred_check
          %p410 = pneg %p110
        $region66: #{tpu_custom_call.1} parent=55 // pred_check_branch
          %412 = sbr.rel (%p410) target = $region68
        $region67: #{tpu_custom_call.1} parent=55 // pred_region
          %413 = dma.done %s406, 6144
        $region68: #{tpu_custom_call.1} parent=55 // pred_fallthru
          _
        %s414 = sand.u32 %s26, 1
        %s415 = scalar_lea.sflag [#allocation4], %s414
        %s416 = sand.u32 %s149, 1
        %s417 = smul.addr %s416, 384
        %s418 = scalar_lea.vmem [#allocation9], %s417
        // Predicated region
        $region69: #{tpu_custom_call.1} parent=55 // pred_check
          %p419 = pneg %p162
        $region70: #{tpu_custom_call.1} parent=55 // pred_check_branch
          %421 = sbr.rel (%p419) target = $region72
        $region71: #{tpu_custom_call.1} parent=55 // pred_region
          %422 = dma.done %s415, 6144
        $region72: #{tpu_custom_call.1} parent=55 // pred_fallthru
          _
        // Predicated region
        $region73: #{tpu_custom_call.1} parent=55 // pred_check
          %p423 = pneg %p209
        $region74: #{tpu_custom_call.1} parent=55 // pred_check_branch
          %425 = sbr.rel (%p423) target = $region76
        $region75: #{tpu_custom_call.1} parent=55 // pred_region
          %426 = dma.done [#allocation7], 2048
        $region76: #{tpu_custom_call.1} parent=55 // pred_fallthru
          _
        %p427 = pneg %p42
        %p428 = pneg %p39
        %p429 = pneg %p63
        %p430 = pneg %p60
        %p431 = pneg %p84
        %p432 = pneg %p81
        %s433 = sand.u32 %s26, 1
        %s434 = scalar_lea.sflag [#allocation4], %s433
        %s435 = sand.u32 %s97, 1
        %s436 = smul.addr %s435, 384
        %s437 = scalar_lea.vmem [#allocation8], %s436
        %p438 = pneg %p110
        %p439 = pneg %p107
        %p440 = scmp.lt.s32.totalorder %s26, 1
        %s441 = scalar_select %p440, %s26, 1
        %s442 = scalar_lea.vmem %s4, %s441
        %p443 = pneg %p136
        %p444 = pneg %p133
        %s445 = sand.u32 %s26, 1
        %s446 = scalar_lea.sflag [#allocation4], %s445
        %s447 = sand.u32 %s149, 1
        %s448 = smul.addr %s447, 384
        %s449 = scalar_lea.vmem [#allocation9], %s448
        %p450 = pneg %p162
        %p451 = pneg %p159
        %p452 = scmp.lt.s32.totalorder %s26, 1
        %s453 = scalar_select %p452, %s26, 1
        %s454 = scalar_lea.vmem %s6, %s453
        %p455 = pneg %p188
        %p456 = pneg %p185
        %p457 = pneg %p209
        %p458 = pneg %p206
        %p459 = pneg %p230
        %p460 = pneg %p227
        %p461 = pneg %p251
        %p462 = pneg %p248
        %p463 = pneg %p272
        %p464 = pneg %p269
        %p465 = scmp.lt.s32.totalorder %s26, 1
        %s466 = scalar_select %p465, %s26, 1
        %s467 = scalar_lea.vmem %s4, %s466
        %p468 = scmp.lt.s32.totalorder %s26, 1
        %s469 = scalar_select %p468, %s26, 1
        %s470 = scalar_lea.vmem %s6, %s469
        %p471 = scmp.eq.s32.totalorder %s26, 0
        // Predicated region
        $region77: #{tpu_custom_call.1} parent=55 // pred_check
          %p472 = pneg %p471
        $region78: #{tpu_custom_call.1} parent=55 // pred_check_branch
          %474 = sbr.rel (%p472) target = $region80
        $region79: #{tpu_custom_call.1} parent=55 // pred_region
          %475 = vst [vmem:[#allocation2] sm:$0xff] 0.0
          %476 = vst [vmem:[#allocation2 + $0x8] sm:$0x3] 0.0
          %477 = vst [vmem:[#allocation2 + $0x10] sm:$0xff] 0.0
          %478 = vst [vmem:[#allocation2 + $0x18] sm:$0x3] 0.0
          %v479 = vld [vmem:[#allocation3] sm:$0xff]
          %v480 = vld [vmem:[#allocation3 + $0x8] sm:$0xff]
          %v481 = vld [vmem:[#allocation6] sm:$0xff]
          %v482 = vld [vmem:[#allocation6 + $0x8] sm:$0xff]
          %v483 = vld [vmem:[#allocation6 + $0x10] sm:$0xff]
          %v484 = vld [vmem:[#allocation6 + $0x18] sm:$0xff]
          %v485 = vld [vmem:[#allocation6 + $0x20] sm:$0xff]
          %v486 = vld [vmem:[#allocation6 + $0x28] sm:$0xff]
          %v487 = vld [vmem:[#allocation6 + $0x30] sm:$0xff]
          %v488 = vld [vmem:[#allocation6 + $0x38] sm:$0xff]
          %v489 = vld [vmem:[#allocation6 + $0x40] sm:$0xff]
          %v490 = vld [vmem:[#allocation6 + $0x48] sm:$0xff]
          %v491 = vld [vmem:[#allocation6 + $0x50] sm:$0xff]
          %v492 = vld [vmem:[#allocation6 + $0x58] sm:$0xff]
          %v493 = vld [vmem:[#allocation6 + $0x60] sm:$0xff]
          %v494 = vld [vmem:[#allocation6 + $0x68] sm:$0xff]
          %v495 = vld [vmem:[#allocation6 + $0x70] sm:$0xff]
          %v496 = vld [vmem:[#allocation6 + $0x78] sm:$0xff]
          %v497 = vld [vmem:[%s2] sm:$0x1]
          %v499 = vlaneseq
          %v500 = vshrl.u32 %v499, 7
          %v501 = vsub.s32 0, %v500
          %v502 = vrot.slane %v497, %v501
          %504 = vmatprep.subr.mxu0 0.0
          %505 = vmatpush1.msra.mxu0 %v481
          %506 = vmatprep.subr.mxu0 0.0
          %507 = vmatpush1.msra.mxu0 %v482
          %508 = vmatprep.subr.mxu0 0.0
          %509 = vmatpush1.msra.mxu0 %v483
          %510 = vmatprep.subr.mxu0 0.0
          %511 = vmatpush1.msra.mxu0 %v484
          %512 = vmatprep.subr.mxu0 0.0
          %513 = vmatpush1.msra.mxu0 %v485
          %514 = vmatprep.subr.mxu0 0.0
          %515 = vmatpush1.msra.mxu0 %v486
          %516 = vmatprep.subr.mxu0 0.0
          %517 = vmatpush1.msra.mxu0 %v487
          %518 = vmatprep.subr.mxu0 0.0
          %519 = vmatpush1.msra.mxu0 %v488
          %520 = vmatprep.subr.mxu0 0.0
          %521 = vmatpush1.msra.mxu0 %v489
          %522 = vmatprep.subr.mxu0 0.0
          %523 = vmatpush1.msra.mxu0 %v490
          %524 = vmatprep.subr.mxu0 0.0
          %525 = vmatpush1.msra.mxu0 %v491
          %526 = vmatprep.subr.mxu0 0.0
          %527 = vmatpush1.msra.mxu0 %v492
          %528 = vmatprep.subr.mxu0 0.0
          %529 = vmatpush1.msra.mxu0 %v493
          %530 = vmatprep.subr.mxu0 0.0
          %531 = vmatpush1.msra.mxu0 %v494
          %532 = vmatprep.subr.mxu0 0.0
          %533 = vmatpush1.msra.mxu0 %v495
          %534 = vmatprep.subr.mxu0 0.0
          %535 = vmatpush1.msra.mxu0 %v496
          %536 = vmatprep.subr.mxu0 0.0
          %537 = vmatpush1.msra.mxu0 0.0
          %538 = vmatprep.subr.mxu0 0.0
          %539 = vmatpush1.msra.mxu0 0.0
          %540 = vmatprep.subr.mxu0 0.0
          %541 = vmatpush1.msra.mxu0 0.0
          %542 = vmatprep.subr.mxu0 0.0
          %543 = vmatpush1.msra.mxu0 0.0
          %544 = vmatprep.subr.mxu0 0.0
          %545 = vmatpush1.msra.mxu0 0.0
          %546 = vmatprep.subr.mxu0 0.0
          %547 = vmatpush1.msra.mxu0 0.0
          %548 = vmatprep.subr.mxu0 0.0
          %549 = vmatpush1.msra.mxu0 0.0
          %550 = vmatprep.subr.mxu0 0.0
          %551 = vmatpush1.msra.mxu0 0.0
          %552 = vmatprep.subr.mxu0 0.0
          %553 = vmatpush1.msra.mxu0 0.0
          %554 = vmatprep.subr.mxu0 0.0
          %555 = vmatpush1.msra.mxu0 0.0
          %556 = vmatprep.subr.mxu0 0.0
          %557 = vmatpush1.msra.mxu0 0.0
          %558 = vmatprep.subr.mxu0 0.0
          %559 = vmatpush1.msra.mxu0 0.0
          %560 = vmatprep.subr.mxu0 0.0
          %561 = vmatpush1.msra.mxu0 0.0
          %562 = vmatprep.subr.mxu0 0.0
          %563 = vmatpush1.msra.mxu0 0.0
          %564 = vmatprep.subr.mxu0 0.0
          %565 = vmatpush1.msra.mxu0 0.0
          %566 = vmatprep.subr.mxu0 0.0
          %567 = vmatpush1.msra.mxu0 0.0
          %568 = vmatprep.mubr.f32.mxu0 0.0
          %569 = vmatmul.mubr.f32.gmra.mrb[0].mxu0 %v479
          %v570 = vpop.f32.mrb[0].mxu0
          %v571 = vadd.f32 %v502, %v570
          %v572 = vpop.f32.mrb[0].mxu0
          %573 = vmatprep.mubr.f32.mxu0 0.0
          %574 = vmatmul.mubr.f32.gmra.mrb[0].mxu0 %v480
          %v575 = vpop.f32.mrb[0].mxu0
          %v576 = vadd.f32 %v502, %v575
          %v577 = vpop.f32.mrb[0].mxu0
          %578 = vdwg.mxu0
          %579 = vst [vmem:[#allocation2 + $0x1] sm:$0xff] %v571
          %580 = vst [vmem:[#allocation2 + $0x11] sm:$0xff] %v576
        $region80: #{tpu_custom_call.1} parent=55 // pred_fallthru
          _
        %v581 = vld [vmem:[#allocation2] sm:$0xff]
        %v582 = vld [vmem:[#allocation2 + $0x10] sm:$0xff]
        %v583 = vld [vmem:[#allocation2 + $0x1] sm:$0xff]
        %v584 = vld [vmem:[#allocation2 + $0x11] sm:$0xff]
        %v585 = vld [vmem:[#allocation2 + $0x2] sm:$0xff]
        %v586 = vld [vmem:[#allocation2 + $0x12] sm:$0xff]
        %v587 = vld [vmem:[%s409] sm:$0xff]
        %v588 = vld [vmem:[%s409 + $0x8] sm:$0xff]
        %v589 = vld [vmem:[%s409 + $0x10] sm:$0xff]
        %v590 = vld [vmem:[%s409 + $0x18] sm:$0xff]
        %v591 = vld [vmem:[%s409 + $0x20] sm:$0xff]
        %v592 = vld [vmem:[%s409 + $0x28] sm:$0xff]
        %v593 = vld [vmem:[%s409 + $0x30] sm:$0xff]
        %v594 = vld [vmem:[%s409 + $0x38] sm:$0xff]
        %v595 = vld [vmem:[%s409 + $0x40] sm:$0xff]
        %v596 = vld [vmem:[%s409 + $0x48] sm:$0xff]
        %v597 = vld [vmem:[%s409 + $0x50] sm:$0xff]
        %v598 = vld [vmem:[%s409 + $0x58] sm:$0xff]
        %v599 = vld [vmem:[%s409 + $0x60] sm:$0xff]
        %v600 = vld [vmem:[%s409 + $0x68] sm:$0xff]
        %v601 = vld [vmem:[%s409 + $0x70] sm:$0xff]
        %v602 = vld [vmem:[%s409 + $0x78] sm:$0xff]
        %v603 = vld [vmem:[%s409 + $0x80] sm:$0xff]
        %v604 = vld [vmem:[%s409 + $0x88] sm:$0xff]
        %v605 = vld [vmem:[%s409 + $0x90] sm:$0xff]
        %v606 = vld [vmem:[%s409 + $0x98] sm:$0xff]
        %v607 = vld [vmem:[%s409 + $0xa0] sm:$0xff]
        %v608 = vld [vmem:[%s409 + $0xa8] sm:$0xff]
        %v609 = vld [vmem:[%s409 + $0xb0] sm:$0xff]
        %v610 = vld [vmem:[%s409 + $0xb8] sm:$0xff]
        %v611 = vld [vmem:[%s409 + $0xc0] sm:$0xff]
        %v612 = vld [vmem:[%s409 + $0xc8] sm:$0xff]
        %v613 = vld [vmem:[%s409 + $0xd0] sm:$0xff]
        %v614 = vld [vmem:[%s409 + $0xd8] sm:$0xff]
        %v615 = vld [vmem:[%s409 + $0xe0] sm:$0xff]
        %v616 = vld [vmem:[%s409 + $0xe8] sm:$0xff]
        %v617 = vld [vmem:[%s409 + $0xf0] sm:$0xff]
        %v618 = vld [vmem:[%s409 + $0xf8] sm:$0xff]
        %v619 = vld [vmem:[%s409 + $0x100] sm:$0xff]
        %v620 = vld [vmem:[%s409 + $0x108] sm:$0xff]
        %v621 = vld [vmem:[%s409 + $0x110] sm:$0xff]
        %v622 = vld [vmem:[%s409 + $0x118] sm:$0xff]
        %v623 = vld [vmem:[%s409 + $0x120] sm:$0xff]
        %v624 = vld [vmem:[%s409 + $0x128] sm:$0xff]
        %v625 = vld [vmem:[%s409 + $0x130] sm:$0xff]
        %v626 = vld [vmem:[%s409 + $0x138] sm:$0xff]
        %v627 = vld [vmem:[%s409 + $0x140] sm:$0xff]
        %v628 = vld [vmem:[%s409 + $0x148] sm:$0xff]
        %v629 = vld [vmem:[%s409 + $0x150] sm:$0xff]
        %v630 = vld [vmem:[%s409 + $0x158] sm:$0xff]
        %v631 = vld [vmem:[%s409 + $0x160] sm:$0xff]
        %v632 = vld [vmem:[%s409 + $0x168] sm:$0xff]
        %v633 = vld [vmem:[%s409 + $0x170] sm:$0xff]
        %v634 = vld [vmem:[%s409 + $0x178] sm:$0xff]
        %v635 = vld [vmem:[%s467] sm:$0x1]
        %v637 = vlaneseq
        %v638 = vshrl.u32 %v637, 7
        %v639 = vsub.s32 0, %v638
        %v640 = vrot.slane %v635, %v639
        %642 = vmatprep.subr.mxu0 0.0
        %643 = vmatpush1.msra.mxu0 %v587
        %644 = vmatprep.subr.mxu0 0.0
        %645 = vmatpush1.msra.mxu0 %v588
        %646 = vmatprep.subr.mxu0 0.0
        %647 = vmatpush1.msra.mxu0 %v589
        %648 = vmatprep.subr.mxu0 0.0
        %649 = vmatpush1.msra.mxu0 %v590
        %650 = vmatprep.subr.mxu0 0.0
        %651 = vmatpush1.msra.mxu0 %v591
        %652 = vmatprep.subr.mxu0 0.0
        %653 = vmatpush1.msra.mxu0 %v592
        %654 = vmatprep.subr.mxu0 0.0
        %655 = vmatpush1.msra.mxu0 %v593
        %656 = vmatprep.subr.mxu0 0.0
        %657 = vmatpush1.msra.mxu0 %v594
        %658 = vmatprep.subr.mxu0 0.0
        %659 = vmatpush1.msra.mxu0 %v595
        %660 = vmatprep.subr.mxu0 0.0
        %661 = vmatpush1.msra.mxu0 %v596
        %662 = vmatprep.subr.mxu0 0.0
        %663 = vmatpush1.msra.mxu0 %v597
        %664 = vmatprep.subr.mxu0 0.0
        %665 = vmatpush1.msra.mxu0 %v598
        %666 = vmatprep.subr.mxu0 0.0
        %667 = vmatpush1.msra.mxu0 %v599
        %668 = vmatprep.subr.mxu0 0.0
        %669 = vmatpush1.msra.mxu0 %v600
        %670 = vmatprep.subr.mxu0 0.0
        %671 = vmatpush1.msra.mxu0 %v601
        %672 = vmatprep.subr.mxu0 0.0
        %673 = vmatpush1.msra.mxu0 %v602
        %674 = vmatprep.subr.mxu0 0.0
        %675 = vmatpush1.msra.mxu0 %v603
        %676 = vmatprep.subr.mxu0 0.0
        %677 = vmatpush1.msra.mxu0 %v604
        %678 = vmatprep.subr.mxu0 0.0
        %679 = vmatpush1.msra.mxu0 %v605
        %680 = vmatprep.subr.mxu0 0.0
        %681 = vmatpush1.msra.mxu0 %v606
        %682 = vmatprep.subr.mxu0 0.0
        %683 = vmatpush1.msra.mxu0 %v607
        %684 = vmatprep.subr.mxu0 0.0
        %685 = vmatpush1.msra.mxu0 %v608
        %686 = vmatprep.subr.mxu0 0.0
        %687 = vmatpush1.msra.mxu0 %v609
        %688 = vmatprep.subr.mxu0 0.0
        %689 = vmatpush1.msra.mxu0 %v610
        %690 = vmatprep.subr.mxu0 0.0
        %691 = vmatpush1.msra.mxu0 %v611
        %692 = vmatprep.subr.mxu0 0.0
        %693 = vmatpush1.msra.mxu0 %v612
        %694 = vmatprep.subr.mxu0 0.0
        %695 = vmatpush1.msra.mxu0 %v613
        %696 = vmatprep.subr.mxu0 0.0
        %697 = vmatpush1.msra.mxu0 %v614
        %698 = vmatprep.subr.mxu0 0.0
        %699 = vmatpush1.msra.mxu0 %v615
        %700 = vmatprep.subr.mxu0 0.0
        %701 = vmatpush1.msra.mxu0 %v616
        %702 = vmatprep.subr.mxu0 0.0
        %703 = vmatpush1.msra.mxu0 %v617
        %704 = vmatprep.subr.mxu0 0.0
        %705 = vmatpush1.msra.mxu0 %v618
        %706 = vmatprep.mubr.f32.mxu0 %v583
        %707 = vmatmul.mubr.f32.gmra.mrb[0].mxu0 %v581
        %v708 = vpop.f32.mrb[0].mxu0
        %v709 = vadd.f32 %v640, %v708
        %v710 = vpop.f32.mrb[0].mxu0
        %711 = vmatprep.mubr.f32.mxu0 %v584
        %712 = vmatmul.mubr.f32.gmra.mrb[0].mxu0 %v582
        %v713 = vpop.f32.mrb[0].mxu0
        %v714 = vadd.f32 %v640, %v713
        %v715 = vpop.f32.mrb[0].mxu0
        %716 = vdwg.mxu0
        %717 = vmatprep.subr.mxu0 0.0
        %718 = vmatpush1.msra.mxu0 %v619
        %719 = vmatprep.subr.mxu0 0.0
        %720 = vmatpush1.msra.mxu0 %v620
        %721 = vmatprep.subr.mxu0 0.0
        %722 = vmatpush1.msra.mxu0 %v621
        %723 = vmatprep.subr.mxu0 0.0
        %724 = vmatpush1.msra.mxu0 %v622
        %725 = vmatprep.subr.mxu0 0.0
        %726 = vmatpush1.msra.mxu0 %v623
        %727 = vmatprep.subr.mxu0 0.0
        %728 = vmatpush1.msra.mxu0 %v624
        %729 = vmatprep.subr.mxu0 0.0
        %730 = vmatpush1.msra.mxu0 %v625
        %731 = vmatprep.subr.mxu0 0.0
        %732 = vmatpush1.msra.mxu0 %v626
        %733 = vmatprep.subr.mxu0 0.0
        %734 = vmatpush1.msra.mxu0 %v627
        %735 = vmatprep.subr.mxu0 0.0
        %736 = vmatpush1.msra.mxu0 %v628
        %737 = vmatprep.subr.mxu0 0.0
        %738 = vmatpush1.msra.mxu0 %v629
        %739 = vmatprep.subr.mxu0 0.0
        %740 = vmatpush1.msra.mxu0 %v630
        %741 = vmatprep.subr.mxu0 0.0
        %742 = vmatpush1.msra.mxu0 %v631
        %743 = vmatprep.subr.mxu0 0.0
        %744 = vmatpush1.msra.mxu0 %v632
        %745 = vmatprep.subr.mxu0 0.0
        %746 = vmatpush1.msra.mxu0 %v633
        %747 = vmatprep.subr.mxu0 0.0
        %748 = vmatpush1.msra.mxu0 %v634
        %749 = vmatprep.subr.mxu0 0.0
        %750 = vmatpush1.msra.mxu0 0.0
        %751 = vmatprep.subr.mxu0 0.0
        %752 = vmatpush1.msra.mxu0 0.0
        %753 = vmatprep.subr.mxu0 0.0
        %754 = vmatpush1.msra.mxu0 0.0
        %755 = vmatprep.subr.mxu0 0.0
        %756 = vmatpush1.msra.mxu0 0.0
        %757 = vmatprep.subr.mxu0 0.0
        %758 = vmatpush1.msra.mxu0 0.0
        %759 = vmatprep.subr.mxu0 0.0
        %760 = vmatpush1.msra.mxu0 0.0
        %761 = vmatprep.subr.mxu0 0.0
        %762 = vmatpush1.msra.mxu0 0.0
        %763 = vmatprep.subr.mxu0 0.0
        %764 = vmatpush1.msra.mxu0 0.0
        %765 = vmatprep.subr.mxu0 0.0
        %766 = vmatpush1.msra.mxu0 0.0
        %767 = vmatprep.subr.mxu0 0.0
        %768 = vmatpush1.msra.mxu0 0.0
        %769 = vmatprep.subr.mxu0 0.0
        %770 = vmatpush1.msra.mxu0 0.0
        %771 = vmatprep.subr.mxu0 0.0
        %772 = vmatpush1.msra.mxu0 0.0
        %773 = vmatprep.subr.mxu0 0.0
        %774 = vmatpush1.msra.mxu0 0.0
        %775 = vmatprep.subr.mxu0 0.0
        %776 = vmatpush1.msra.mxu0 0.0
        %777 = vmatprep.subr.mxu0 0.0
        %778 = vmatpush1.msra.mxu0 0.0
        %779 = vmatprep.subr.mxu0 0.0
        %780 = vmatpush1.msra.mxu0 0.0
        %781 = vmatprep.mubr.f32.mxu0 0.0
        %782 = vmatmul.mubr.f32.gmra.mrb[0].mxu0 %v585
        %v783 = vpop.f32.mrb[0].mxu0
        %v784 = vadd.f32 %v709, %v783
        %v785 = vpop.f32.mrb[0].mxu0
        %786 = vmatprep.mubr.f32.mxu0 0.0
        %787 = vmatmul.mubr.f32.gmra.mrb[0].mxu0 %v586
        %v788 = vpop.f32.mrb[0].mxu0
        %v789 = vadd.f32 %v714, %v788
        %v790 = vpop.f32.mrb[0].mxu0
        %791 = vdwg.mxu0
        %v792 = vld [vmem:[%s418] sm:$0xff]
        %v793 = vld [vmem:[%s418 + $0x8] sm:$0xff]
        %v794 = vld [vmem:[%s418 + $0x10] sm:$0xff]
        %v795 = vld [vmem:[%s418 + $0x18] sm:$0xff]
        %v796 = vld [vmem:[%s418 + $0x20] sm:$0xff]
        %v797 = vld [vmem:[%s418 + $0x28] sm:$0xff]
        %v798 = vld [vmem:[%s418 + $0x30] sm:$0xff]
        %v799 = vld [vmem:[%s418 + $0x38] sm:$0xff]
        %v800 = vld [vmem:[%s418 + $0x40] sm:$0xff]
        %v801 = vld [vmem:[%s418 + $0x48] sm:$0xff]
        %v802 = vld [vmem:[%s418 + $0x50] sm:$0xff]
        %v803 = vld [vmem:[%s418 + $0x58] sm:$0xff]
        %v804 = vld [vmem:[%s418 + $0x60] sm:$0xff]
        %v805 = vld [vmem:[%s418 + $0x68] sm:$0xff]
        %v806 = vld [vmem:[%s418 + $0x70] sm:$0xff]
        %v807 = vld [vmem:[%s418 + $0x78] sm:$0xff]
        %v808 = vld [vmem:[%s418 + $0x80] sm:$0xff]
        %v809 = vld [vmem:[%s418 + $0x88] sm:$0xff]
        %v810 = vld [vmem:[%s418 + $0x90] sm:$0xff]
        %v811 = vld [vmem:[%s418 + $0x98] sm:$0xff]
        %v812 = vld [vmem:[%s418 + $0xa0] sm:$0xff]
        %v813 = vld [vmem:[%s418 + $0xa8] sm:$0xff]
        %v814 = vld [vmem:[%s418 + $0xb0] sm:$0xff]
        %v815 = vld [vmem:[%s418 + $0xb8] sm:$0xff]
        %v816 = vld [vmem:[%s418 + $0xc0] sm:$0xff]
        %v817 = vld [vmem:[%s418 + $0xc8] sm:$0xff]
        %v818 = vld [vmem:[%s418 + $0xd0] sm:$0xff]
        %v819 = vld [vmem:[%s418 + $0xd8] sm:$0xff]
        %v820 = vld [vmem:[%s418 + $0xe0] sm:$0xff]
        %v821 = vld [vmem:[%s418 + $0xe8] sm:$0xff]
        %v822 = vld [vmem:[%s418 + $0xf0] sm:$0xff]
        %v823 = vld [vmem:[%s418 + $0xf8] sm:$0xff]
        %v824 = vld [vmem:[%s418 + $0x100] sm:$0xff]
        %v825 = vld [vmem:[%s418 + $0x108] sm:$0xff]
        %v826 = vld [vmem:[%s418 + $0x110] sm:$0xff]
        %v827 = vld [vmem:[%s418 + $0x118] sm:$0xff]
        %v828 = vld [vmem:[%s418 + $0x120] sm:$0xff]
        %v829 = vld [vmem:[%s418 + $0x128] sm:$0xff]
        %v830 = vld [vmem:[%s418 + $0x130] sm:$0xff]
        %v831 = vld [vmem:[%s418 + $0x138] sm:$0xff]
        %v832 = vld [vmem:[%s418 + $0x140] sm:$0xff]
        %v833 = vld [vmem:[%s418 + $0x148] sm:$0xff]
        %v834 = vld [vmem:[%s418 + $0x150] sm:$0xff]
        %v835 = vld [vmem:[%s418 + $0x158] sm:$0xff]
        %v836 = vld [vmem:[%s418 + $0x160] sm:$0xff]
        %v837 = vld [vmem:[%s418 + $0x168] sm:$0xff]
        %v838 = vld [vmem:[%s418 + $0x170] sm:$0xff]
        %v839 = vld [vmem:[%s418 + $0x178] sm:$0xff]
        %v840 = vld [vmem:[%s470] sm:$0x1]
        %v842 = vlaneseq
        %v843 = vshrl.u32 %v842, 7
        %v844 = vsub.s32 0, %v843
        %v845 = vrot.slane %v840, %v844
        %847 = vmatprep.subr.mxu0 0.0
        %848 = vmatpush1.msra.mxu0 %v792
        %849 = vmatprep.subr.mxu0 0.0
        %850 = vmatpush1.msra.mxu0 %v793
        %851 = vmatprep.subr.mxu0 0.0
        %852 = vmatpush1.msra.mxu0 %v794
        %853 = vmatprep.subr.mxu0 0.0
        %854 = vmatpush1.msra.mxu0 %v795
        %855 = vmatprep.subr.mxu0 0.0
        %856 = vmatpush1.msra.mxu0 %v796
        %857 = vmatprep.subr.mxu0 0.0
        %858 = vmatpush1.msra.mxu0 %v797
        %859 = vmatprep.subr.mxu0 0.0
        %860 = vmatpush1.msra.mxu0 %v798
        %861 = vmatprep.subr.mxu0 0.0
        %862 = vmatpush1.msra.mxu0 %v799
        %863 = vmatprep.subr.mxu0 0.0
        %864 = vmatpush1.msra.mxu0 %v800
        %865 = vmatprep.subr.mxu0 0.0
        %866 = vmatpush1.msra.mxu0 %v801
        %867 = vmatprep.subr.mxu0 0.0
        %868 = vmatpush1.msra.mxu0 %v802
        %869 = vmatprep.subr.mxu0 0.0
        %870 = vmatpush1.msra.mxu0 %v803
        %871 = vmatprep.subr.mxu0 0.0
        %872 = vmatpush1.msra.mxu0 %v804
        %873 = vmatprep.subr.mxu0 0.0
        %874 = vmatpush1.msra.mxu0 %v805
        %875 = vmatprep.subr.mxu0 0.0
        %876 = vmatpush1.msra.mxu0 %v806
        %877 = vmatprep.subr.mxu0 0.0
        %878 = vmatpush1.msra.mxu0 %v807
        %879 = vmatprep.subr.mxu0 0.0
        %880 = vmatpush1.msra.mxu0 %v808
        %881 = vmatprep.subr.mxu0 0.0
        %882 = vmatpush1.msra.mxu0 %v809
        %883 = vmatprep.subr.mxu0 0.0
        %884 = vmatpush1.msra.mxu0 %v810
        %885 = vmatprep.subr.mxu0 0.0
        %886 = vmatpush1.msra.mxu0 %v811
        %887 = vmatprep.subr.mxu0 0.0
        %888 = vmatpush1.msra.mxu0 %v812
        %889 = vmatprep.subr.mxu0 0.0
        %890 = vmatpush1.msra.mxu0 %v813
        %891 = vmatprep.subr.mxu0 0.0
        %892 = vmatpush1.msra.mxu0 %v814
        %893 = vmatprep.subr.mxu0 0.0
        %894 = vmatpush1.msra.mxu0 %v815
        %895 = vmatprep.subr.mxu0 0.0
        %896 = vmatpush1.msra.mxu0 %v816
        %897 = vmatprep.subr.mxu0 0.0
        %898 = vmatpush1.msra.mxu0 %v817
        %899 = vmatprep.subr.mxu0 0.0
        %900 = vmatpush1.msra.mxu0 %v818
        %901 = vmatprep.subr.mxu0 0.0
        %902 = vmatpush1.msra.mxu0 %v819
        %903 = vmatprep.subr.mxu0 0.0
        %904 = vmatpush1.msra.mxu0 %v820
        %905 = vmatprep.subr.mxu0 0.0
        %906 = vmatpush1.msra.mxu0 %v821
        %907 = vmatprep.subr.mxu0 0.0
        %908 = vmatpush1.msra.mxu0 %v822
        %909 = vmatprep.subr.mxu0 0.0
        %910 = vmatpush1.msra.mxu0 %v823
        %911 = vmatprep.mubr.f32.mxu0 %v583
        %912 = vmatmul.mubr.f32.gmra.mrb[0].mxu0 %v581
        %v913 = vpop.f32.mrb[0].mxu0
        %v914 = vadd.f32 %v845, %v913
        %v915 = vpop.f32.mrb[0].mxu0
        %916 = vmatprep.mubr.f32.mxu0 %v584
        %917 = vmatmul.mubr.f32.gmra.mrb[0].mxu0 %v582
        %v918 = vpop.f32.mrb[0].mxu0
        %v919 = vadd.f32 %v845, %v918
        %v920 = vpop.f32.mrb[0].mxu0
        %921 = vdwg.mxu0
        %922 = vmatprep.subr.mxu0 0.0
        %923 = vmatpush1.msra.mxu0 %v824
        %924 = vmatprep.subr.mxu0 0.0
        %925 = vmatpush1.msra.mxu0 %v825
        %926 = vmatprep.subr.mxu0 0.0
        %927 = vmatpush1.msra.mxu0 %v826
        %928 = vmatprep.subr.mxu0 0.0
        %929 = vmatpush1.msra.mxu0 %v827
        %930 = vmatprep.subr.mxu0 0.0
        %931 = vmatpush1.msra.mxu0 %v828
        %932 = vmatprep.subr.mxu0 0.0
        %933 = vmatpush1.msra.mxu0 %v829
        %934 = vmatprep.subr.mxu0 0.0
        %935 = vmatpush1.msra.mxu0 %v830
        %936 = vmatprep.subr.mxu0 0.0
        %937 = vmatpush1.msra.mxu0 %v831
        %938 = vmatprep.subr.mxu0 0.0
        %939 = vmatpush1.msra.mxu0 %v832
        %940 = vmatprep.subr.mxu0 0.0
        %941 = vmatpush1.msra.mxu0 %v833
        %942 = vmatprep.subr.mxu0 0.0
        %943 = vmatpush1.msra.mxu0 %v834
        %944 = vmatprep.subr.mxu0 0.0
        %945 = vmatpush1.msra.mxu0 %v835
        %946 = vmatprep.subr.mxu0 0.0
        %947 = vmatpush1.msra.mxu0 %v836
        %948 = vmatprep.subr.mxu0 0.0
        %949 = vmatpush1.msra.mxu0 %v837
        %950 = vmatprep.subr.mxu0 0.0
        %951 = vmatpush1.msra.mxu0 %v838
        %952 = vmatprep.subr.mxu0 0.0
        %953 = vmatpush1.msra.mxu0 %v839
        %954 = vmatprep.subr.mxu0 0.0
        %955 = vmatpush1.msra.mxu0 0.0
        %956 = vmatprep.subr.mxu0 0.0
        %957 = vmatpush1.msra.mxu0 0.0
        %958 = vmatprep.subr.mxu0 0.0
        %959 = vmatpush1.msra.mxu0 0.0
        %960 = vmatprep.subr.mxu0 0.0
        %961 = vmatpush1.msra.mxu0 0.0
        %962 = vmatprep.subr.mxu0 0.0
        %963 = vmatpush1.msra.mxu0 0.0
        %964 = vmatprep.subr.mxu0 0.0
        %965 = vmatpush1.msra.mxu0 0.0
        %966 = vmatprep.subr.mxu0 0.0
        %967 = vmatpush1.msra.mxu0 0.0
        %968 = vmatprep.subr.mxu0 0.0
        %969 = vmatpush1.msra.mxu0 0.0
        %970 = vmatprep.subr.mxu0 0.0
        %971 = vmatpush1.msra.mxu0 0.0
        %972 = vmatprep.subr.mxu0 0.0
        %973 = vmatpush1.msra.mxu0 0.0
        %974 = vmatprep.subr.mxu0 0.0
        %975 = vmatpush1.msra.mxu0 0.0
        %976 = vmatprep.subr.mxu0 0.0
        %977 = vmatpush1.msra.mxu0 0.0
        %978 = vmatprep.subr.mxu0 0.0
        %979 = vmatpush1.msra.mxu0 0.0
        %980 = vmatprep.subr.mxu0 0.0
        %981 = vmatpush1.msra.mxu0 0.0
        %982 = vmatprep.subr.mxu0 0.0
        %983 = vmatpush1.msra.mxu0 0.0
        %984 = vmatprep.subr.mxu0 0.0
        %985 = vmatpush1.msra.mxu0 0.0
        %986 = vmatprep.mubr.f32.mxu0 0.0
        %987 = vmatmul.mubr.f32.gmra.mrb[0].mxu0 %v585
        %v988 = vpop.f32.mrb[0].mxu0
        %v989 = vadd.f32 %v914, %v988
        %v990 = vpop.f32.mrb[0].mxu0
        %991 = vmatprep.mubr.f32.mxu0 0.0
        %992 = vmatmul.mubr.f32.gmra.mrb[0].mxu0 %v586
        %v993 = vpop.f32.mrb[0].mxu0
        %v994 = vadd.f32 %v919, %v993
        %v995 = vpop.f32.mrb[0].mxu0
        %996 = vdwg.mxu0
        %v997 = vxor.u32 %v989, 2147483648
        %v998 = vxor.u32 %v994, 2147483648
        %v999 = vmul.f32 %v997, 1.442695
        %v1000 = vpow.pop %v999
        %v1001 = vmul.f32 %v998, 1.442695
        %v1002 = vpow.pop %v1001
        %v1003 = vadd.f32 %v1000, 1.0
        %v1004 = vadd.f32 %v1002, 1.0
        %v1005 = vrcp.pop %v1003
        %v1006 = vmul.f32 1.0, %v1005
        %v1007 = vrcp.pop %v1004
        %v1008 = vmul.f32 1.0, %v1007
        %v1009 = vmul.f32 %v784, %v1006
        %v1010 = vmul.f32 %v789, %v1008
        %v1011 = vadd.f32 %v1009, %v583
        %v1012 = vadd.f32 %v1010, %v584
        %v1013 = vmul.f32 %v1011, 0.70710677
        %v1014 = vmul.f32 %v1012, 0.70710677
        %1015 = vst [vmem:[#allocation2 + $0x1] sm:$0xff] %v1013
        %1016 = vst [vmem:[#allocation2 + $0x11] sm:$0xff] %v1014
        %p1017 = scmp.eq.s32.totalorder %s26, 1
        // Predicated region
        $region81: #{tpu_custom_call.1} parent=55 // pred_check
          %p1018 = pneg %p1017
        $region82: #{tpu_custom_call.1} parent=55 // pred_check_branch
          %1020 = sbr.rel (%p1018) target = $region84
        $region83: #{tpu_custom_call.1} parent=55 // pred_region
          %v1021 = vld [vmem:[#allocation2 + $0x1] sm:$0xff]
          %v1022 = vld [vmem:[#allocation2 + $0x11] sm:$0xff]
          %v1023 = vld [vmem:[#allocation10] sm:$0xff]
          %v1024 = vld [vmem:[#allocation10 + $0x8] sm:$0xff]
          %v1025 = vld [vmem:[#allocation10 + $0x10] sm:$0xff]
          %v1026 = vld [vmem:[#allocation10 + $0x18] sm:$0xff]
          %v1027 = vld [vmem:[#allocation10 + $0x20] sm:$0xff]
          %v1028 = vld [vmem:[#allocation10 + $0x28] sm:$0xff]
          %v1029 = vld [vmem:[#allocation10 + $0x30] sm:$0xff]
          %v1030 = vld [vmem:[#allocation10 + $0x38] sm:$0xff]
          %v1031 = vld [vmem:[#allocation10 + $0x40] sm:$0xff]
          %v1032 = vld [vmem:[#allocation10 + $0x48] sm:$0xff]
          %v1033 = vld [vmem:[#allocation10 + $0x50] sm:$0xff]
          %v1034 = vld [vmem:[#allocation10 + $0x58] sm:$0xff]
          %v1035 = vld [vmem:[#allocation10 + $0x60] sm:$0xff]
          %v1036 = vld [vmem:[#allocation10 + $0x68] sm:$0xff]
          %v1037 = vld [vmem:[#allocation10 + $0x70] sm:$0xff]
          %v1038 = vld [vmem:[#allocation10 + $0x78] sm:$0xff]
          %v1039 = vld [vmem:[%s8] sm:$0x1]
          %v1041 = vlaneseq
          %v1042 = vshrl.u32 %v1041, 7
          %v1043 = vsub.s32 0, %v1042
          %v1044 = vrot.slane %v1039, %v1043
          %1046 = vmatprep.subr.mxu0 0.0
          %1047 = vmatpush1.msra.mxu0 %v1023
          %1048 = vmatprep.subr.mxu0 0.0
          %1049 = vmatpush1.msra.mxu0 %v1024
          %1050 = vmatprep.subr.mxu0 0.0
          %1051 = vmatpush1.msra.mxu0 %v1025
          %1052 = vmatprep.subr.mxu0 0.0
          %1053 = vmatpush1.msra.mxu0 %v1026
          %1054 = vmatprep.subr.mxu0 0.0
          %1055 = vmatpush1.msra.mxu0 %v1027
          %1056 = vmatprep.subr.mxu0 0.0
          %1057 = vmatpush1.msra.mxu0 %v1028
          %1058 = vmatprep.subr.mxu0 0.0
          %1059 = vmatpush1.msra.mxu0 %v1029
          %1060 = vmatprep.subr.mxu0 0.0
          %1061 = vmatpush1.msra.mxu0 %v1030
          %1062 = vmatprep.subr.mxu0 0.0
          %1063 = vmatpush1.msra.mxu0 %v1031
          %1064 = vmatprep.subr.mxu0 0.0
          %1065 = vmatpush1.msra.mxu0 %v1032
          %1066 = vmatprep.subr.mxu0 0.0
          %1067 = vmatpush1.msra.mxu0 %v1033
          %1068 = vmatprep.subr.mxu0 0.0
          %1069 = vmatpush1.msra.mxu0 %v1034
          %1070 = vmatprep.subr.mxu0 0.0
          %1071 = vmatpush1.msra.mxu0 %v1035
          %1072 = vmatprep.subr.mxu0 0.0
          %1073 = vmatpush1.msra.mxu0 %v1036
          %1074 = vmatprep.subr.mxu0 0.0
          %1075 = vmatpush1.msra.mxu0 %v1037
          %1076 = vmatprep.subr.mxu0 0.0
          %1077 = vmatpush1.msra.mxu0 %v1038
          %1078 = vmatprep.subr.mxu0 0.0
          %1079 = vmatpush1.msra.mxu0 0.0
          %1080 = vmatprep.subr.mxu0 0.0
          %1081 = vmatpush1.msra.mxu0 0.0
          %1082 = vmatprep.subr.mxu0 0.0
          %1083 = vmatpush1.msra.mxu0 0.0
          %1084 = vmatprep.subr.mxu0 0.0
          %1085 = vmatpush1.msra.mxu0 0.0
          %1086 = vmatprep.subr.mxu0 0.0
          %1087 = vmatpush1.msra.mxu0 0.0
          %1088 = vmatprep.subr.mxu0 0.0
          %1089 = vmatpush1.msra.mxu0 0.0
          %1090 = vmatprep.subr.mxu0 0.0
          %1091 = vmatpush1.msra.mxu0 0.0
          %1092 = vmatprep.subr.mxu0 0.0
          %1093 = vmatpush1.msra.mxu0 0.0
          %1094 = vmatprep.subr.mxu0 0.0
          %1095 = vmatpush1.msra.mxu0 0.0
          %1096 = vmatprep.subr.mxu0 0.0
          %1097 = vmatpush1.msra.mxu0 0.0
          %1098 = vmatprep.subr.mxu0 0.0
          %1099 = vmatpush1.msra.mxu0 0.0
          %1100 = vmatprep.subr.mxu0 0.0
          %1101 = vmatpush1.msra.mxu0 0.0
          %1102 = vmatprep.subr.mxu0 0.0
          %1103 = vmatpush1.msra.mxu0 0.0
          %1104 = vmatprep.subr.mxu0 0.0
          %1105 = vmatpush1.msra.mxu0 0.0
          %1106 = vmatprep.subr.mxu0 0.0
          %1107 = vmatpush1.msra.mxu0 0.0
          %1108 = vmatprep.subr.mxu0 0.0
          %1109 = vmatpush1.msra.mxu0 0.0
          %1110 = vmatprep.mubr.f32.mxu0 0.0
          %1111 = vmatmul.mubr.f32.gmra.mrb[0].mxu0 %v1021
          %v1112 = vpop.f32.mrb[0].mxu0
          %v1113 = vadd.f32 %v1044, %v1112
          %v1114 = vpop.f32.mrb[0].mxu0
          %1115 = vmatprep.mubr.f32.mxu0 0.0
          %1116 = vmatmul.mubr.f32.gmra.mrb[0].mxu0 %v1022
          %v1117 = vpop.f32.mrb[0].mxu0
          %v1118 = vadd.f32 %v1044, %v1117
          %v1119 = vpop.f32.mrb[0].mxu0
          %1120 = vdwg.mxu0
          %1121 = vst [vmem:[#allocation11] sm:$0xff] %v1113
          %1122 = vst [vmem:[#allocation11 + $0x8] sm:$0xff] %v1118
          %v1123 = vld [vmem:[#allocation3] sm:$0xff]
          %v1124 = vld [vmem:[#allocation3 + $0x8] sm:$0xff]
          %v1125 = vadd.f32 %v1113, %v1123
          %v1126 = vadd.f32 %v1118, %v1124
          %v1127 = vmul.f32 %v1125, 0.70710677
          %v1128 = vmul.f32 %v1126, 0.70710677
          %1129 = vst [vmem:[#allocation12] sm:$0xff] %v1127
          %1130 = vst [vmem:[#allocation12 + $0x8] sm:$0xff] %v1128
        $region84: #{tpu_custom_call.1} parent=55 // pred_fallthru
          _
        // Predicated region
        $region85: #{tpu_custom_call.1} parent=55 // pred_check
          %p1131 = pneg %p248
        $region86: #{tpu_custom_call.1} parent=55 // pred_check_branch
          %1133 = sbr.rel (%p1131) target = $region88
        $region87: #{tpu_custom_call.1} parent=55 // pred_region
          %s1135 = ssub.s32 256, 256
          %1136 = vsyncadd [#allocation5], %s1135
          %s1137 = sshll.u32 [#allocation11], 4
          %s1138 = int_to_ptr.vmem [resolvable:$true] %s1137
          %1143 = dma.vmem_to_hbm [thread:$0]  %s1138, 256, %s9, [#allocation5], 128, 128, 8
        $region88: #{tpu_custom_call.1} parent=55 // pred_fallthru
          _
        // Predicated region
        $region89: #{tpu_custom_call.1} parent=55 // pred_check
          %p1144 = pneg %p269
        $region90: #{tpu_custom_call.1} parent=55 // pred_check_branch
          %1146 = sbr.rel (%p1144) target = $region92
        $region91: #{tpu_custom_call.1} parent=55 // pred_region
          %s1148 = ssub.s32 256, 256
          %1149 = vsyncadd [#allocation13], %s1148
          %s1150 = sshll.u32 [#allocation12], 4
          %s1151 = int_to_ptr.vmem [resolvable:$true] %s1150
          %1156 = dma.vmem_to_hbm [thread:$0]  %s1151, 256, %s10, [#allocation13], 128, 128, 8
        $region92: #{tpu_custom_call.1} parent=55 // pred_fallthru
          _
        // Predicated region
        $region93: #{tpu_custom_call.1} parent=55 // pred_check
          %p1157 = pneg %p248
        $region94: #{tpu_custom_call.1} parent=55 // pred_check_branch
          %1159 = sbr.rel (%p1157) target = $region96
        $region95: #{tpu_custom_call.1} parent=55 // pred_region
          %1160 = dma.done [#allocation5], 256
        $region96: #{tpu_custom_call.1} parent=55 // pred_fallthru
          _
        // Predicated region
        $region97: #{tpu_custom_call.1} parent=55 // pred_check
          %p1161 = pneg %p269
        $region98: #{tpu_custom_call.1} parent=55 // pred_check_branch
          %1163 = sbr.rel (%p1161) target = $region100
        $region99: #{tpu_custom_call.1} parent=55 // pred_region
          %1164 = dma.done [#allocation13], 256
        $region100: #{tpu_custom_call.1} parent=55 // pred_fallthru
          _
      $region56: #{tpu_custom_call.1} parent=5 // pred_fallthru
        _
      %p1165 = scmp.le.s32.totalorder 2, %s21
      // Predicated region
      $region101: #{tpu_custom_call.1} parent=5 // pred_check
        %p1166 = pneg %p1165
      $region102: #{tpu_custom_call.1} parent=5 // pred_check_branch
        %1168 = sbr.rel (%p1166) target = $region104
      $region103: #{tpu_custom_call.1} parent=5 // pred_region
        %s1169 = ssub.s32 %s21, 2
      $region104: #{tpu_custom_call.1} parent=5 // pred_fallthru
        _
    $region6: #{tpu_custom_call.1} parent=1 // loop_footer
      %s25 = sadd.s32 1, %s21
    $region7: #{tpu_custom_call.1} parent=1 // loop_footer_branch
      %20 = sbr.rel target = $region3
    $region8: #{tpu_custom_call.1} parent=1 // loop_exit
      _
    %1170 = vsyncpa [#allocation4], 1
    %s1171 = scalar_lea.sflag [#allocation4], 1
    %1172 = vsyncpa %s1171, 1
    %1173 = vsyncpa [#allocation7], 1
    %1174 = vsyncpa [#allocation5], 1
    %s1175 = scalar_lea.sflag [#allocation5], 1
    %1176 = vsyncpa %s1175, 1
    %1177 = vsyncpa [#allocation13], 1

</llo_original>
